<compile_context>
chip_gen: v7x
topology: tpu7x:2x2x1
jax: 0.10.0
libtpu: 0.0.40
codegen_flags: <defaults>
</compile_context>

<pallas_src>
import functools
import math

import jax
import jax.numpy as jnp
import numpy as np
from jax.experimental import pallas as pl
from jax.experimental.pallas import tpu as pltpu


def _aspp_kernel(x_ref, w_ref, shift_ref, o_ref, acc_ref, *, K, dilation, Wp, n_out):
    """Grid = (batch, cin_tile); cin_tile is the reduction ('arbitrary') axis.

    x_ref:     (1, tCin, Lin)      zero-padded input, spatial dims flattened
                                   (Lin = (Hp + 1) * Wp, NCHW layout)
    w_ref:     (K*K, Cout, tCin)   BN-scale-folded weights, tap-major
    shift_ref: (Cout, 1)           folded BN shift (beta - mean * scale)
    o_ref:     (1, Cout, n_out)    output tile, n_out = H * Wp (padded columns hold
                                   junk and are sliced off in the wrapper)
    acc_ref:   (Cout, n_out) f32   VMEM accumulator, persists across Cin tiles
    """
    c = pl.program_id(1)
    n_c = pl.num_programs(1)
    cout = w_ref.shape[1]

    # Partial conv for this Cin tile: K*K shifted-window matmuls on the MXU.
    part = jnp.zeros((cout, n_out), dtype=jnp.float32)
    for ky in range(K):
        for kx in range(K):
            off = (ky * Wp + kx) * dilation           # static flat shift of this tap
            patch = x_ref[0, :, off:off + n_out]      # (tCin, n_out), no reshape
            part = part + jnp.dot(w_ref[ky * K + kx], patch,
                                  preferred_element_type=jnp.float32)

    @pl.when(c == 0)
    def _():
        acc_ref[...] = part

    @pl.when(c != 0)
    def _():
        acc_ref[...] = acc_ref[...] + part

    # Epilogue on the last Cin tile: BN shift (scale already folded into w) + ReLU.
    @pl.when(c == n_c - 1)
    def _():
        y = acc_ref[...] + shift_ref[...]
        o_ref[0, :, :] = jnp.maximum(y, 0.0).astype(o_ref.dtype)


def aspp_module_forward(x_nchw, weight, bn_gamma, bn_beta, bn_mean, bn_var, *,
                        padding, dilation, eps=1e-5,
                        compute_dtype=jnp.float32, cin_tile=128):
    """Forward pass of _ASPPModule.

    x_nchw : (B, Cin, H, W)
    weight : (Cout, Cin, K, K)  (torch Conv2d OIHW layout, bias=False)
    returns: (B, Cout, H, W) in x_nchw.dtype
    """
    B, Cin, H, W = x_nchw.shape
    Cout, Cin_w, K, K2 = weight.shape
    assert Cin_w == Cin and K == K2
    if 2 * padding != dilation * (K - 1):
        raise ValueError(
            "kernel assumes 'same' spatial output: 2*padding == dilation*(K-1)")

    Hp, Wp = H + 2 * padding, W + 2 * padding
    n_out = H * Wp                 # outputs are computed on the padded width
    Lin = (Hp + 1) * Wp            # +1 zero row keeps every tap window in bounds

    # ---- BN folding (f32): scale into weights, shift added in-kernel ----------
    # TODO(synk): PyTorch BN in training mode uses batch statistics; here BN is the
    #             standard inference affine using the provided running stats.
    scale = bn_gamma / jnp.sqrt(bn_var + eps)                        # (Cout,)
    shift = (bn_beta - bn_mean * scale).reshape(Cout, 1).astype(jnp.float32)
    w_folded = weight * scale[:, None, None, None]                   # (Cout,Cin,K,K)
    # (Cout, Cin, K, K) -> (K*K, Cout, Cin): tap-major, Cout rows for NCHW output.
    w_taps = jnp.transpose(w_folded, (2, 3, 0, 1)).reshape(K * K, Cout, Cin)

    # ---- Cin tiling (reduction grid axis) --------------------------------------
    tCin = Cin if Cin <= 256 else cin_tile
    pad_cin = (-Cin) % tCin
    Cin_p = Cin + pad_cin
    n_cin = Cin_p // tCin
    if pad_cin:
        w_taps = jnp.pad(w_taps, ((0, 0), (0, 0), (0, pad_cin)))

    # ---- spatial zero-pad + flatten spatial dims into lanes --------------------
    x_pad = jnp.pad(x_nchw, ((0, 0), (0, pad_cin),
                             (padding, padding + 1), (padding, padding)))
    x_flat = x_pad.reshape(B, Cin_p, Lin).astype(compute_dtype)
    w_taps = w_taps.astype(compute_dtype)

    # ---- VMEM budget (input/weights double-buffered by the pipeline) -----------
    itb = jnp.dtype(compute_dtype).itemsize
    out_itb = jnp.dtype(x_nchw.dtype).itemsize
    est = (2 * (tCin * Lin * itb)
           + 2 * (K * K * Cout * tCin * itb)
           + 2 * (Cout * 4)
           + 2 * (Cout * n_out * out_itb)
           + Cout * n_out * 4)
    vmem_limit = int(min(110 * 1024 * 1024,
                         max(est * 5 // 4 + (1 << 20), 32 * 1024 * 1024)))

    kernel = functools.partial(_aspp_kernel, K=K, dilation=dilation,
                               Wp=Wp, n_out=n_out)

    out_flat = pl.pallas_call(
        kernel,
        out_shape=jax.ShapeDtypeStruct((B, Cout, n_out), x_nchw.dtype),
        grid_spec=pltpu.PrefetchScalarGridSpec(
            num_scalar_prefetch=0,
            grid=(B, n_cin),
            in_specs=[
                pl.BlockSpec((1, tCin, Lin), lambda b, c: (b, c, 0)),
                pl.BlockSpec((K * K, Cout, tCin), lambda b, c: (0, 0, c)),
                pl.BlockSpec((Cout, 1), lambda b, c: (0, 0)),
            ],
            out_specs=pl.BlockSpec((1, Cout, n_out), lambda b, c: (b, 0, 0)),
            scratch_shapes=[pltpu.VMEM((Cout, n_out), jnp.float32)],
        ),
        compiler_params=pltpu.CompilerParams(
            dimension_semantics=("parallel", "arbitrary"),
            vmem_limit_bytes=vmem_limit),
    )(x_flat, w_taps, shift)

    # (B, Cout, H*Wp) -> (B, Cout, H, Wp) is a free reshape; drop the padded
    # columns to obtain the NCHW result directly (no output transpose needed).
    return out_flat.reshape(B, Cout, H, Wp)[:, :, :, :W]


def _reference(x_nchw, weight, bn_gamma, bn_beta, bn_mean, bn_var,
               *, padding, dilation, eps=1e-5):
    """Pure-JAX reference (lax conv) for correctness checking."""
    y = jax.lax.conv_general_dilated(
        x_nchw, weight,
        window_strides=(1, 1),
        padding=[(padding, padding), (padding, padding)],
        rhs_dilation=(dilation, dilation),
        dimension_numbers=("NCHW", "OIHW", "NCHW"))
    scale = (bn_gamma / jnp.sqrt(bn_var + eps)).reshape(1, -1, 1, 1)
    shift = (bn_beta - bn_mean * bn_gamma / jnp.sqrt(bn_var + eps)).reshape(1, -1, 1, 1)
    return jnp.maximum(y * scale + shift, 0.0)


if __name__ == "__main__":
    # Small shapes consistent with the module: 3x3 atrous conv branch of ASPP.
    B, Cin, Cout, H, W = 2, 4, 8, 16, 16
    K, dilation = 3, 2
    padding = dilation  # ASPP convention for the 3x3 branches

    key = jax.random.PRNGKey(0)
    kx, kw = jax.random.split(key)

    x = jax.random.normal(kx, (B, Cin, H, W), dtype=jnp.float32)

    # kaiming_normal_ (fan_in, gain=sqrt(2)) deterministic init
    fan_in = Cin * K * K
    std = math.sqrt(2.0 / fan_in)
    weight = jax.random.normal(kw, (Cout, Cin, K, K), dtype=jnp.float32) * std

    # BatchNorm params per _init_weight: weight=1, bias=0; running stats 0/1.
    bn_gamma = jnp.ones((Cout,), jnp.float32)
    bn_beta = jnp.zeros((Cout,), jnp.float32)
    bn_mean = jnp.zeros((Cout,), jnp.float32)
    bn_var = jnp.ones((Cout,), jnp.float32)

    ref = _reference(x, weight, bn_gamma, bn_beta, bn_mean, bn_var,
                     padding=padding, dilation=dilation)

    # f32 path (matches torch numerics).
    out = aspp_module_forward(x, weight, bn_gamma, bn_beta, bn_mean, bn_var,
                              padding=padding, dilation=dilation)
    out = jax.block_until_ready(out)
    np.testing.assert_allclose(np.asarray(out), np.asarray(ref),
                               rtol=1e-4, atol=1e-4)

    # bf16 MXU fast path (v6e/v7x): inputs/weights bf16, f32 accumulation.
    out_bf16 = aspp_module_forward(x, weight, bn_gamma, bn_beta, bn_mean, bn_var,
                                   padding=padding, dilation=dilation,
                                   compute_dtype=jnp.bfloat16)
    out_bf16 = jax.block_until_ready(out_bf16)
    np.testing.assert_allclose(np.asarray(out_bf16), np.asarray(ref),
                               rtol=1e-1, atol=1e-1)

    print("KERNEL_OK")
</pallas_src>

<mosaic_0001>
module attributes {stable_mosaic.version = 11 : i64} {
  func.func @_aspp_kernel(%arg0: i32, %arg1: i32, %arg2: memref<1x4x420xf32, #tpu.memory_space<vmem>>, %arg3: memref<9x8x4xf32, #tpu.memory_space<vmem>>, %arg4: memref<8x1xf32, #tpu.memory_space<vmem>>, %arg5: memref<1x8x320xf32, #tpu.memory_space<vmem>>, %arg6: memref<8x320xf32, #tpu.memory_space<vmem>>) attributes {dimension_semantics = [#tpu.dimension_semantics<parallel>, #tpu.dimension_semantics<arbitrary>], iteration_bounds = array<i64: 2, 1>, scalar_prefetch = 0 : i64, scratch_operands = 1 : i64, tpu.core_type = #tpu.core_type<tc>, window_params = [{transform_indices = @transform_0, window_bounds = array<i64: 1, 4, 420>}, {transform_indices = @transform_1, window_bounds = array<i64: 9, 8, 4>}, {pipeline_mode = #tpu.pipeline_mode<synchronous>, transform_indices = @transform_2, window_bounds = array<i64: 8, 1>}, {transform_indices = @transform_3, window_bounds = array<i64: 1, 8, 320>}]} {
    %cst = arith.constant 0.000000e+00 : f32
    %0 = vector.broadcast %cst : f32 to vector<8x320xf32>
    %c0 = arith.constant 0 : index
    %c0_0 = arith.constant 0 : index
    %c0_1 = arith.constant 0 : index
    %1 = vector.load %arg2[%c0, %c0_0, %c0_1] : memref<1x4x420xf32, #tpu.memory_space<vmem>>, vector<1x4x320xf32>
    %2 = vector.shape_cast %1 : vector<1x4x320xf32> to vector<4x320xf32>
    %c0_2 = arith.constant 0 : index
    %c0_3 = arith.constant 0 : index
    %c0_4 = arith.constant 0 : index
    %3 = vector.load %arg3[%c0_2, %c0_3, %c0_4] : memref<9x8x4xf32, #tpu.memory_space<vmem>>, vector<1x8x4xf32>
    %4 = vector.shape_cast %3 : vector<1x8x4xf32> to vector<8x4xf32>
    %cst_5 = arith.constant dense<0.000000e+00> : vector<8x320xf32>
    %5 = tpu.matmul %4, %2, %cst_5 {dimension_numbers = #tpu.dot_dimension_numbers<[1], [0], [0], [1], [0, 0, 1, 1], [], []>} : vector<8x4xf32>, vector<4x320xf32>, vector<8x320xf32> -> vector<8x320xf32>
    %6 = arith.addf %0, %5 : vector<8x320xf32>
    %c0_6 = arith.constant 0 : index
    %c0_7 = arith.constant 0 : index
    %c2 = arith.constant 2 : index
    %7 = vector.load %arg2[%c0_6, %c0_7, %c2] : memref<1x4x420xf32, #tpu.memory_space<vmem>>, vector<1x4x320xf32>
    %8 = vector.shape_cast %7 : vector<1x4x320xf32> to vector<4x320xf32>
    %c1 = arith.constant 1 : index
    %c0_8 = arith.constant 0 : index
    %c0_9 = arith.constant 0 : index
    %9 = vector.load %arg3[%c1, %c0_8, %c0_9] : memref<9x8x4xf32, #tpu.memory_space<vmem>>, vector<1x8x4xf32>
    %10 = vector.shape_cast %9 : vector<1x8x4xf32> to vector<8x4xf32>
    %cst_10 = arith.constant dense<0.000000e+00> : vector<8x320xf32>
    %11 = tpu.matmul %10, %8, %cst_10 {dimension_numbers = #tpu.dot_dimension_numbers<[1], [0], [0], [1], [0, 0, 1, 1], [], []>} : vector<8x4xf32>, vector<4x320xf32>, vector<8x320xf32> -> vector<8x320xf32>
    %12 = arith.addf %6, %11 : vector<8x320xf32>
    %c0_11 = arith.constant 0 : index
    %c0_12 = arith.constant 0 : index
    %c4 = arith.constant 4 : index
    %13 = vector.load %arg2[%c0_11, %c0_12, %c4] : memref<1x4x420xf32, #tpu.memory_space<vmem>>, vector<1x4x320xf32>
    %14 = vector.shape_cast %13 : vector<1x4x320xf32> to vector<4x320xf32>
    %c2_13 = arith.constant 2 : index
    %c0_14 = arith.constant 0 : index
    %c0_15 = arith.constant 0 : index
    %15 = vector.load %arg3[%c2_13, %c0_14, %c0_15] : memref<9x8x4xf32, #tpu.memory_space<vmem>>, vector<1x8x4xf32>
    %16 = vector.shape_cast %15 : vector<1x8x4xf32> to vector<8x4xf32>
    %cst_16 = arith.constant dense<0.000000e+00> : vector<8x320xf32>
    %17 = tpu.matmul %16, %14, %cst_16 {dimension_numbers = #tpu.dot_dimension_numbers<[1], [0], [0], [1], [0, 0, 1, 1], [], []>} : vector<8x4xf32>, vector<4x320xf32>, vector<8x320xf32> -> vector<8x320xf32>
    %18 = arith.addf %12, %17 : vector<8x320xf32>
    %c0_17 = arith.constant 0 : index
    %c0_18 = arith.constant 0 : index
    %c40 = arith.constant 40 : index
    %19 = vector.load %arg2[%c0_17, %c0_18, %c40] : memref<1x4x420xf32, #tpu.memory_space<vmem>>, vector<1x4x320xf32>
    %20 = vector.shape_cast %19 : vector<1x4x320xf32> to vector<4x320xf32>
    %c3 = arith.constant 3 : index
    %c0_19 = arith.constant 0 : index
    %c0_20 = arith.constant 0 : index
    %21 = vector.load %arg3[%c3, %c0_19, %c0_20] : memref<9x8x4xf32, #tpu.memory_space<vmem>>, vector<1x8x4xf32>
    %22 = vector.shape_cast %21 : vector<1x8x4xf32> to vector<8x4xf32>
    %cst_21 = arith.constant dense<0.000000e+00> : vector<8x320xf32>
    %23 = tpu.matmul %22, %20, %cst_21 {dimension_numbers = #tpu.dot_dimension_numbers<[1], [0], [0], [1], [0, 0, 1, 1], [], []>} : vector<8x4xf32>, vector<4x320xf32>, vector<8x320xf32> -> vector<8x320xf32>
    %24 = arith.addf %18, %23 : vector<8x320xf32>
    %c0_22 = arith.constant 0 : index
    %c0_23 = arith.constant 0 : index
    %c42 = arith.constant 42 : index
    %25 = vector.load %arg2[%c0_22, %c0_23, %c42] : memref<1x4x420xf32, #tpu.memory_space<vmem>>, vector<1x4x320xf32>
    %26 = vector.shape_cast %25 : vector<1x4x320xf32> to vector<4x320xf32>
    %c4_24 = arith.constant 4 : index
    %c0_25 = arith.constant 0 : index
    %c0_26 = arith.constant 0 : index
    %27 = vector.load %arg3[%c4_24, %c0_25, %c0_26] : memref<9x8x4xf32, #tpu.memory_space<vmem>>, vector<1x8x4xf32>
    %28 = vector.shape_cast %27 : vector<1x8x4xf32> to vector<8x4xf32>
    %cst_27 = arith.constant dense<0.000000e+00> : vector<8x320xf32>
    %29 = tpu.matmul %28, %26, %cst_27 {dimension_numbers = #tpu.dot_dimension_numbers<[1], [0], [0], [1], [0, 0, 1, 1], [], []>} : vector<8x4xf32>, vector<4x320xf32>, vector<8x320xf32> -> vector<8x320xf32>
    %30 = arith.addf %24, %29 : vector<8x320xf32>
    %c0_28 = arith.constant 0 : index
    %c0_29 = arith.constant 0 : index
    %c44 = arith.constant 44 : index
    %31 = vector.load %arg2[%c0_28, %c0_29, %c44] : memref<1x4x420xf32, #tpu.memory_space<vmem>>, vector<1x4x320xf32>
    %32 = vector.shape_cast %31 : vector<1x4x320xf32> to vector<4x320xf32>
    %c5 = arith.constant 5 : index
    %c0_30 = arith.constant 0 : index
    %c0_31 = arith.constant 0 : index
    %33 = vector.load %arg3[%c5, %c0_30, %c0_31] : memref<9x8x4xf32, #tpu.memory_space<vmem>>, vector<1x8x4xf32>
    %34 = vector.shape_cast %33 : vector<1x8x4xf32> to vector<8x4xf32>
    %cst_32 = arith.constant dense<0.000000e+00> : vector<8x320xf32>
    %35 = tpu.matmul %34, %32, %cst_32 {dimension_numbers = #tpu.dot_dimension_numbers<[1], [0], [0], [1], [0, 0, 1, 1], [], []>} : vector<8x4xf32>, vector<4x320xf32>, vector<8x320xf32> -> vector<8x320xf32>
    %36 = arith.addf %30, %35 : vector<8x320xf32>
    %c0_33 = arith.constant 0 : index
    %c0_34 = arith.constant 0 : index
    %c80 = arith.constant 80 : index
    %37 = vector.load %arg2[%c0_33, %c0_34, %c80] : memref<1x4x420xf32, #tpu.memory_space<vmem>>, vector<1x4x320xf32>
    %38 = vector.shape_cast %37 : vector<1x4x320xf32> to vector<4x320xf32>
    %c6 = arith.constant 6 : index
    %c0_35 = arith.constant 0 : index
    %c0_36 = arith.constant 0 : index
    %39 = vector.load %arg3[%c6, %c0_35, %c0_36] : memref<9x8x4xf32, #tpu.memory_space<vmem>>, vector<1x8x4xf32>
    %40 = vector.shape_cast %39 : vector<1x8x4xf32> to vector<8x4xf32>
    %cst_37 = arith.constant dense<0.000000e+00> : vector<8x320xf32>
    %41 = tpu.matmul %40, %38, %cst_37 {dimension_numbers = #tpu.dot_dimension_numbers<[1], [0], [0], [1], [0, 0, 1, 1], [], []>} : vector<8x4xf32>, vector<4x320xf32>, vector<8x320xf32> -> vector<8x320xf32>
    %42 = arith.addf %36, %41 : vector<8x320xf32>
    %c0_38 = arith.constant 0 : index
    %c0_39 = arith.constant 0 : index
    %c82 = arith.constant 82 : index
    %43 = vector.load %arg2[%c0_38, %c0_39, %c82] : memref<1x4x420xf32, #tpu.memory_space<vmem>>, vector<1x4x320xf32>
    %44 = vector.shape_cast %43 : vector<1x4x320xf32> to vector<4x320xf32>
    %c7 = arith.constant 7 : index
    %c0_40 = arith.constant 0 : index
    %c0_41 = arith.constant 0 : index
    %45 = vector.load %arg3[%c7, %c0_40, %c0_41] : memref<9x8x4xf32, #tpu.memory_space<vmem>>, vector<1x8x4xf32>
    %46 = vector.shape_cast %45 : vector<1x8x4xf32> to vector<8x4xf32>
    %cst_42 = arith.constant dense<0.000000e+00> : vector<8x320xf32>
    %47 = tpu.matmul %46, %44, %cst_42 {dimension_numbers = #tpu.dot_dimension_numbers<[1], [0], [0], [1], [0, 0, 1, 1], [], []>} : vector<8x4xf32>, vector<4x320xf32>, vector<8x320xf32> -> vector<8x320xf32>
    %48 = arith.addf %42, %47 : vector<8x320xf32>
    %c0_43 = arith.constant 0 : index
    %c0_44 = arith.constant 0 : index
    %c84 = arith.constant 84 : index
    %49 = vector.load %arg2[%c0_43, %c0_44, %c84] : memref<1x4x420xf32, #tpu.memory_space<vmem>>, vector<1x4x320xf32>
    %50 = vector.shape_cast %49 : vector<1x4x320xf32> to vector<4x320xf32>
    %c8 = arith.constant 8 : index
    %c0_45 = arith.constant 0 : index
    %c0_46 = arith.constant 0 : index
    %51 = vector.load %arg3[%c8, %c0_45, %c0_46] : memref<9x8x4xf32, #tpu.memory_space<vmem>>, vector<1x8x4xf32>
    %52 = vector.shape_cast %51 : vector<1x8x4xf32> to vector<8x4xf32>
    %cst_47 = arith.constant dense<0.000000e+00> : vector<8x320xf32>
    %53 = tpu.matmul %52, %50, %cst_47 {dimension_numbers = #tpu.dot_dimension_numbers<[1], [0], [0], [1], [0, 0, 1, 1], [], []>} : vector<8x4xf32>, vector<4x320xf32>, vector<8x320xf32> -> vector<8x320xf32>
    %54 = arith.addf %48, %53 : vector<8x320xf32>
    %c0_i32 = arith.constant 0 : i32
    %55 = arith.cmpi eq, %arg1, %c0_i32 : i32
    %56 = arith.extui %55 : i1 to i32
    %c0_i32_48 = arith.constant 0 : i32
    %57 = arith.cmpi ne, %56, %c0_i32_48 : i32
    scf.if %57 {
      %c0_53 = arith.constant 0 : index
      %c0_54 = arith.constant 0 : index
      %64 = vector.load %arg6[%c0_53, %c0_54] : memref<8x320xf32, #tpu.memory_space<vmem>>, vector<8x320xf32>
      tpu.vector_store %arg6[%c0_53, %c0_54], %54 {strides = array<i32>} : memref<8x320xf32, #tpu.memory_space<vmem>>, vector<8x320xf32>,
    } else {
    }
    %c0_i32_49 = arith.constant 0 : i32
    %58 = arith.cmpi ne, %arg1, %c0_i32_49 : i32
    %59 = arith.extui %58 : i1 to i32
    %c0_i32_50 = arith.constant 0 : i32
    %60 = arith.cmpi ne, %59, %c0_i32_50 : i32
    scf.if %60 {
      %c0_53 = arith.constant 0 : index
      %c0_54 = arith.constant 0 : index
      %64 = vector.load %arg6[%c0_53, %c0_54] : memref<8x320xf32, #tpu.memory_space<vmem>>, vector<8x320xf32>
      %65 = arith.addf %64, %54 : vector<8x320xf32>
      %c0_55 = arith.constant 0 : index
      %c0_56 = arith.constant 0 : index
      %66 = vector.load %arg6[%c0_55, %c0_56] : memref<8x320xf32, #tpu.memory_space<vmem>>, vector<8x320xf32>
      tpu.vector_store %arg6[%c0_55, %c0_56], %65 {strides = array<i32>} : memref<8x320xf32, #tpu.memory_space<vmem>>, vector<8x320xf32>,
    } else {
    }
    %c0_i32_51 = arith.constant 0 : i32
    %61 = arith.cmpi eq, %arg1, %c0_i32_51 : i32
    %62 = arith.extui %61 : i1 to i32
    %c0_i32_52 = arith.constant 0 : i32
    %63 = arith.cmpi ne, %62, %c0_i32_52 : i32
    scf.if %63 {
      %c0_53 = arith.constant 0 : index
      %c0_54 = arith.constant 0 : index
      %64 = vector.load %arg6[%c0_53, %c0_54] : memref<8x320xf32, #tpu.memory_space<vmem>>, vector<8x320xf32>
      %c0_55 = arith.constant 0 : index
      %c0_56 = arith.constant 0 : index
      %65 = vector.load %arg4[%c0_55, %c0_56] : memref<8x1xf32, #tpu.memory_space<vmem>>, vector<8x1xf32>
      %66 = vector.broadcast %65 : vector<8x1xf32> to vector<8x320xf32>
      %67 = arith.addf %64, %66 : vector<8x320xf32>
      %cst_57 = arith.constant 0.000000e+00 : f32
      %68 = vector.broadcast %cst_57 : f32 to vector<8x320xf32>
      %69 = arith.maximumf %67, %68 : vector<8x320xf32>
      %c0_58 = arith.constant 0 : index
      %c0_59 = arith.constant 0 : index
      %c0_60 = arith.constant 0 : index
      %70 = vector.load %arg5[%c0_58, %c0_59, %c0_60] : memref<1x8x320xf32, #tpu.memory_space<vmem>>, vector<1x8x320xf32>
      %71 = vector.shape_cast %70 : vector<1x8x320xf32> to vector<8x320xf32>
      %72 = vector.shape_cast %69 : vector<8x320xf32> to vector<1x8x320xf32>
      tpu.vector_store %arg5[%c0_58, %c0_59, %c0_60], %72 {strides = array<i32>} : memref<1x8x320xf32, #tpu.memory_space<vmem>>, vector<1x8x320xf32>,
    } else {
    }
    return
  }
  func.func @transform_0(%arg0: i32, %arg1: i32) -> (i32, i32, i32) {
    %c0_i32 = arith.constant 0 : i32
    %c0_i32_0 = arith.constant 0 : i32
    return %arg0, %arg1, %c0_i32 : i32, i32, i32
  }
  func.func @transform_1(%arg0: i32, %arg1: i32) -> (i32, i32, i32) {
    %c0_i32 = arith.constant 0 : i32
    %c0_i32_0 = arith.constant 0 : i32
    %c0_i32_1 = arith.constant 0 : i32
    return %c0_i32, %c0_i32_0, %arg1 : i32, i32, i32
  }
  func.func @transform_2(%arg0: i32, %arg1: i32) -> (i32, i32) {
    %c0_i32 = arith.constant 0 : i32
    %c0_i32_0 = arith.constant 0 : i32
    %c0_i32_1 = arith.constant 0 : i32
    return %c0_i32, %c0_i32_0 : i32, i32
  }
  func.func @transform_3(%arg0: i32, %arg1: i32) -> (i32, i32, i32) {
    %c0_i32 = arith.constant 0 : i32
    %c0_i32_0 = arith.constant 0 : i32
    %c0_i32_1 = arith.constant 0 : i32
    return %arg0, %c0_i32, %c0_i32_0 : i32, i32, i32
  }
}

</mosaic_0001>

<llo_original>
// kernel: tpu_custom_call.1
$region0: #{tpu_custom_call.1}
  #allocation0 [shape = 'u32[]', space=smem, size = 0x4, offset = 0x4, fixed_abs, tag = 'smem constant byte address 0x4 - core index']
  #allocation1 [shape = 'u32[144,128]{1,0:T(1,128)}', space=vmem, size = 0x12000, scoped, tag = 'internal scratch']
  #allocation2 [shape = 'f32[8,320]{1,0:T(8,128)}', space=vmem, size = 0x3000, scoped, tag = 'scratch operand']
  %s0 = inlined_call_operand.vmem [shape: f32[2,4,420], index: 0, kind: input, shape index: {}]
  %s1 = inlined_call_operand.vmem [shape: f32[9,8,4], index: 1, kind: input, shape index: {}]
  %s2 = inlined_call_operand.vmem [shape: f32[8,1], index: 2, kind: input, shape index: {}]
  %s3 = inlined_call_operand.hbm [shape: f32[2,8,320], index: 3, kind: output, shape index: {}]
  %s4 = sld [smem:[#allocation0]]
  $region57: #{tpu_custom_call.1} parent=0
    _
  %s6 = ssub.s32 1, %s4
  %s7 = scalar_select 0, %s6, %s4
  $region1: #{tpu_custom_call.1} parent=0
    #allocation3 [shape = 'u8[24576]{0}', space=vmem, size = 0x6000, scoped, tag = 'output window, operand 0']
    #allocation4 [shape = 's32[2]{0}', space=sflag, size = 0x8, scoped, tag = 'scoped memory for tpu_custom_call.1']
    %8 = vsyncpa [#allocation4], 0
    %s9 = scalar_lea.sflag [#allocation4], 1
    %10 = vsyncpa %s9, 0
    loop: start=0, step=1, limit=4
    $region2: #{tpu_custom_call.1} parent=1 // loop_pre_header
      _
    $region3: #{tpu_custom_call.1} parent=1 // loop_header
      %s12 = sphi 0, %s16
      %p13 = scmp.ge.s32.totalorder %s12, 4
      %s19 = sphi 0, %s31
      %s20 = sphi 0, %s27
      %s21 = sphi 0, %s19
      %s22 = sphi 0, %s20
      %s23 = sphi 0, %s21
      %s24 = sphi 0, %s22
      %s36 = sphi 0, %s38
      %s39 = sphi 0, %s36
      %s40 = sphi 0, %s39
      %s56 = sphi 0, %s40
      %s62 = sphi 0, %s64
      %s65 = sphi 0, %s62
      %s66 = sphi 0, %s65
      %s82 = sphi 0, %s66
      %s86 = sphi 0, %s86
      %s88 = sphi 0, %s86
      %s89 = sphi 0, %s88
      %s103 = sphi 0, %s89
      %s109 = sphi 0, %s111
      %s112 = sphi 0, %s109
      %s113 = sphi 0, %s112
      %s129 = sphi 0, %s113
    $region4: #{tpu_custom_call.1} parent=1 // loop_header_branch
      %15 = sbr.rel (%p13) target = $region8
    $region5: #{tpu_custom_call.1} parent=1 // loop_body
      %s17 = ssub.s32 %s12, 1
      %s18 = ssub.s32 %s12, 2
      %s25 = sadd.s32 1, %s20
      %p26 = scmp.ge.s32.totalorder %s25, 1
      %s27 = scalar_select %p26, 0, %s25
      %s28 = sadd.s32 1, %s19
      %s29 = scalar_select %p26, %s28, %s19
      %p30 = scmp.ge.s32.totalorder %s29, 2
      %s31 = scalar_select %p30, 0, %s29
      %s32 = ssub.s32 %s19, %s31
      %s33 = ssub.s32 %s20, %s27
      %s34 = sor.u32 %s32, %s33
      %p35 = scmp.eq.s32.totalorder %s34, 0
      %s37 = sadd.s32 %s36, 1
      %s38 = scalar_select %p35, %s36, %s37
      %p41 = pneg %p35
      %p42 = scmp.eq.s32.totalorder %s12, 1
      %p43 = por %p41, %p42
      %p44 = scmp.ne.s32.totalorder %s36, %s39
      %p45 = scmp.eq.s32.totalorder %s12, 0
      %p46 = por %p44, %p45
      %p47 = scmp.ne.s32.totalorder %s36, %s39
      %p48 = scmp.eq.s32.totalorder %s17, 1
      %p49 = por %p47, %p48
      %p50 = scmp.ne.s32.totalorder %s39, %s40
      %p51 = scmp.eq.s32.totalorder %s17, 0
      %p52 = por %p50, %p51
      %p53 = scmp.ne.s32.totalorder %s39, %s40
      %p54 = scmp.eq.s32.totalorder %s18, 1
      %p55 = por %p53, %p54
      %p57 = scmp.ne.s32.totalorder %s40, %s56
      %p58 = scmp.eq.s32.totalorder %s18, 0
      %p59 = por %p57, %p58
      %s60 = ssub.s32 %s20, %s27
      %p61 = scmp.eq.s32.totalorder %s60, 0
      %s63 = sadd.s32 %s62, 1
      %s64 = scalar_select %p61, %s62, %s63
      %p67 = pneg %p61
      %p68 = scmp.eq.s32.totalorder %s12, 1
      %p69 = por %p67, %p68
      %p70 = scmp.ne.s32.totalorder %s62, %s65
      %p71 = scmp.eq.s32.totalorder %s12, 0
      %p72 = por %p70, %p71
      %p73 = scmp.ne.s32.totalorder %s62, %s65
      %p74 = scmp.eq.s32.totalorder %s17, 1
      %p75 = por %p73, %p74
      %p76 = scmp.ne.s32.totalorder %s65, %s66
      %p77 = scmp.eq.s32.totalorder %s17, 0
      %p78 = por %p76, %p77
      %p79 = scmp.ne.s32.totalorder %s65, %s66
      %p80 = scmp.eq.s32.totalorder %s18, 1
      %p81 = por %p79, %p80
      %p83 = scmp.ne.s32.totalorder %s66, %s82
      %p84 = scmp.eq.s32.totalorder %s18, 0
      %p85 = por %p83, %p84
      %s87 = sadd.s32 %s86, 1
      %p90 = scmp.eq.s32.totalorder %s12, 1
      %p91 = scmp.ne.s32.totalorder %s86, %s88
      %p92 = scmp.eq.s32.totalorder %s12, 0
      %p93 = por %p91, %p92
      %p94 = scmp.ne.s32.totalorder %s86, %s88
      %p95 = scmp.eq.s32.totalorder %s17, 1
      %p96 = por %p94, %p95
      %p97 = scmp.ne.s32.totalorder %s88, %s89
      %p98 = scmp.eq.s32.totalorder %s17, 0
      %p99 = por %p97, %p98
      %p100 = scmp.ne.s32.totalorder %s88, %s89
      %p101 = scmp.eq.s32.totalorder %s18, 1
      %p102 = por %p100, %p101
      %p104 = scmp.ne.s32.totalorder %s89, %s103
      %p105 = scmp.eq.s32.totalorder %s18, 0
      %p106 = por %p104, %p105
      %s107 = ssub.s32 %s19, %s31
      %p108 = scmp.eq.s32.totalorder %s107, 0
      %s110 = sadd.s32 %s109, 1
      %s111 = scalar_select %p108, %s109, %s110
      %p114 = pneg %p108
      %p115 = scmp.eq.s32.totalorder %s12, 1
      %p116 = por %p114, %p115
      %p117 = scmp.ne.s32.totalorder %s109, %s112
      %p118 = scmp.eq.s32.totalorder %s12, 0
      %p119 = por %p117, %p118
      %p120 = scmp.ne.s32.totalorder %s109, %s112
      %p121 = scmp.eq.s32.totalorder %s17, 1
      %p122 = por %p120, %p121
      %p123 = scmp.ne.s32.totalorder %s112, %s113
      %p124 = scmp.eq.s32.totalorder %s17, 0
      %p125 = por %p123, %p124
      %p126 = scmp.ne.s32.totalorder %s112, %s113
      %p127 = scmp.eq.s32.totalorder %s18, 1
      %p128 = por %p126, %p127
      %p130 = scmp.ne.s32.totalorder %s113, %s129
      %p131 = scmp.eq.s32.totalorder %s18, 0
      %p132 = por %p130, %p131
      %p133 = scmp.le.s32.totalorder 1, %s12
      %p134 = scmp.lt.s32.totalorder %s12, 3
      %p135 = pnand %p133, %p134
      %p136 = pneg %p135
      // Predicated region
      $region9: #{tpu_custom_call.1} parent=5 // pred_check
        _
      $region10: #{tpu_custom_call.1} parent=5 // pred_check_branch
        %138 = sbr.rel (%p135) target = $region12
      $region11: #{tpu_custom_call.1} parent=5 // pred_region
        %s139 = ssub.s32 %s12, 1
        // Predicated region
        $region13: #{tpu_custom_call.1} parent=11 // pred_check
          %p140 = pneg %p78
        $region14: #{tpu_custom_call.1} parent=11 // pred_check_branch
          %142 = sbr.rel (%p140) target = $region16
        $region15: #{tpu_custom_call.1} parent=11 // pred_region
          %p143 = scmp.lt.s32.totalorder %s22, 0
          %s144 = scalar_select %p143, %s22, 0
          %s145 = smul.addr %s144, 8
          %s146 = scalar_lea.vmem %s1, %s145
        $region16: #{tpu_custom_call.1} parent=11 // pred_fallthru
          _
        // Predicated region
        $region17: #{tpu_custom_call.1} parent=11 // pred_check
          %p147 = pneg %p99
        $region18: #{tpu_custom_call.1} parent=11 // pred_check_branch
          %149 = sbr.rel (%p147) target = $region20
        $region19: #{tpu_custom_call.1} parent=11 // pred_region
          _
        $region20: #{tpu_custom_call.1} parent=11 // pred_fallthru
          _
      $region12: #{tpu_custom_call.1} parent=5 // pred_fallthru
        _
      %p150 = scmp.lt.s32.totalorder %s12, 2
      // Predicated region
      $region21: #{tpu_custom_call.1} parent=5 // pred_check
        %p151 = pneg %p150
      $region22: #{tpu_custom_call.1} parent=5 // pred_check_branch
        %153 = sbr.rel (%p151) target = $region24
      $region23: #{tpu_custom_call.1} parent=5 // pred_region
        // Predicated region
        $region25: #{tpu_custom_call.1} parent=23 // pred_check
          %p154 = pneg %p46
        $region26: #{tpu_custom_call.1} parent=23 // pred_check_branch
          %156 = sbr.rel (%p154) target = $region28
        $region27: #{tpu_custom_call.1} parent=23 // pred_region
          %p157 = scmp.lt.s32.totalorder %s19, 1
          %s158 = scalar_select %p157, %s19, 1
          %p159 = scmp.lt.s32.totalorder %s20, 0
          %s160 = scalar_select %p159, %s20, 0
          %s161 = smul.addr %s160, 4
          %s162 = smul.addr %s158, 4
          %s163 = sadd.s32 %s161, %s162
          %s164 = smul.addr %s163, 4
          %s165 = scalar_lea.vmem %s0, %s164
        $region28: #{tpu_custom_call.1} parent=23 // pred_fallthru
          _
      $region24: #{tpu_custom_call.1} parent=5 // pred_fallthru
        _
      %p166 = scmp.le.s32.totalorder 1, %s12
      %p167 = scmp.lt.s32.totalorder %s12, 3
      %p168 = pnand %p166, %p167
      %p169 = pneg %p168
      // Predicated region
      $region29: #{tpu_custom_call.1} parent=5 // pred_check
        _
      $region30: #{tpu_custom_call.1} parent=5 // pred_check_branch
        %171 = sbr.rel (%p168) target = $region32
      $region31: #{tpu_custom_call.1} parent=5 // pred_region
        %s172 = ssub.s32 %s12, 1
        %p173 = scmp.lt.s32.totalorder %s21, 1
        %s174 = scalar_select %p173, %s21, 1
        %p175 = scmp.lt.s32.totalorder %s22, 0
        %s176 = scalar_select %p175, %s22, 0
        %s177 = smul.addr %s176, 4
        %s178 = smul.addr %s174, 4
        %s179 = sadd.s32 %s177, %s178
        %s180 = smul.addr %s179, 4
        %s181 = scalar_lea.vmem %s0, %s180
        %p182 = pneg %p52
        %p183 = pneg %p49
        %p184 = scmp.lt.s32.totalorder %s22, 0
        %s185 = scalar_select %p184, %s22, 0
        %s186 = smul.addr %s185, 8
        %s187 = scalar_lea.vmem %s1, %s186
        %p188 = pneg %p78
        %p189 = pneg %p75
        %p190 = pneg %p99
        %p191 = pneg %p96
        %p192 = pneg %p125
        %p193 = pneg %p122
        %s194 = sand.u32 %s112, 1
        %s195 = scalar_lea.sflag [#allocation4], %s194
        %s196 = sand.u32 %s112, 1
        %s197 = smul.addr %s196, 24
        %s198 = scalar_lea.vmem [#allocation3], %s197
        %p199 = scmp.lt.s32.totalorder %s21, 1
        %s200 = scalar_select %p199, %s21, 1
        %p201 = scmp.lt.s32.totalorder %s22, 0
        %s202 = scalar_select %p201, %s22, 0
        %s203 = smul.addr %s202, 4
        %s204 = smul.addr %s200, 4
        %s205 = sadd.s32 %s203, %s204
        %s206 = smul.addr %s205, 4
        %s207 = scalar_lea.vmem %s0, %s206
        %p208 = scmp.lt.s32.totalorder %s22, 0
        %s209 = scalar_select %p208, %s22, 0
        %s210 = smul.addr %s209, 8
        %s211 = scalar_lea.vmem %s1, %s210
        %v212 = vld [vmem:[%s207] sm:$0xff]
        %v213 = vld [vmem:[%s207 + $0x8] sm:$0xf]
        %v214 = vld [vmem:[%s211] sm:$0xff]
        %s215 = scalar_lea.vmem %s211, 8
        %v216 = vld [vmem:[%s215] sm:$0xff]
        %v219 = vcombine.high %v212, %v212
        %220 = vrot.lane.b32.xlu0 %v212, 126
        %v221 = vpop.permute.xlu0 %220
        %222 = vrot.lane.b32.xlu0 %v219, 126
        %v223 = vpop.permute.xlu0 %222
        %224 = vrot.lane.b32.xlu0 %v213, 126
        %v225 = vpop.permute.xlu0 %224
        %vm226 = vcmask 1031168
        %v227 = vsel %vm226, %v221, %v223
        %v228 = vsel %vm226, %v223, %v225
        %vm229 = vcmask 31744
        %v231 = vsel %vm229, %v216, 0
        %vm233 = vcmask 1043456
        %v234 = vsel %vm233, %v227, 0
        %v236 = vsel %vm233, %v228, 0
        %v238 = vsel %vm233, %v225, 0
        %240 = vmatprep.subr.mxu0 %v236
        %241 = vmatpush1.msra.mxu0 %v234
        %242 = vmatprep.subr.mxu0 0.0
        %243 = vmatpush1.msra.mxu0 0.0
        %244 = vmatprep.subr.mxu0 0.0
        %245 = vmatpush1.msra.mxu0 0.0
        %246 = vmatprep.subr.mxu0 0.0
        %247 = vmatpush1.msra.mxu0 0.0
        %248 = vmatprep.subr.mxu0 0.0
        %249 = vmatpush1.msra.mxu0 0.0
        %250 = vmatprep.subr.mxu0 0.0
        %251 = vmatpush1.msra.mxu0 0.0
        %252 = vmatprep.subr.mxu0 0.0
        %253 = vmatpush1.msra.mxu0 0.0
        %254 = vmatprep.subr.mxu0 0.0
        %255 = vmatpush1.msra.mxu0 0.0
        %256 = vmatprep.subr.mxu0 0.0
        %257 = vmatpush1.msra.mxu0 0.0
        %258 = vmatprep.subr.mxu0 0.0
        %259 = vmatpush1.msra.mxu0 0.0
        %260 = vmatprep.subr.mxu0 0.0
        %261 = vmatpush1.msra.mxu0 0.0
        %262 = vmatprep.subr.mxu0 0.0
        %263 = vmatpush1.msra.mxu0 0.0
        %264 = vmatprep.subr.mxu0 0.0
        %265 = vmatpush1.msra.mxu0 0.0
        %266 = vmatprep.subr.mxu0 0.0
        %267 = vmatpush1.msra.mxu0 0.0
        %268 = vmatprep.subr.mxu0 0.0
        %269 = vmatpush1.msra.mxu0 0.0
        %270 = vmatprep.subr.mxu0 0.0
        %271 = vmatpush1.msra.mxu0 0.0
        %272 = vmatprep.subr.mxu0 0.0
        %273 = vmatpush1.msra.mxu0 0.0
        %274 = vmatprep.subr.mxu0 0.0
        %275 = vmatpush1.msra.mxu0 0.0
        %276 = vmatprep.subr.mxu0 0.0
        %277 = vmatpush1.msra.mxu0 0.0
        %278 = vmatprep.subr.mxu0 0.0
        %279 = vmatpush1.msra.mxu0 0.0
        %280 = vmatprep.subr.mxu0 0.0
        %281 = vmatpush1.msra.mxu0 0.0
        %282 = vmatprep.subr.mxu0 0.0
        %283 = vmatpush1.msra.mxu0 0.0
        %284 = vmatprep.subr.mxu0 0.0
        %285 = vmatpush1.msra.mxu0 0.0
        %286 = vmatprep.subr.mxu0 0.0
        %287 = vmatpush1.msra.mxu0 0.0
        %288 = vmatprep.subr.mxu0 0.0
        %289 = vmatpush1.msra.mxu0 0.0
        %290 = vmatprep.subr.mxu0 0.0
        %291 = vmatpush1.msra.mxu0 0.0
        %292 = vmatprep.subr.mxu0 0.0
        %293 = vmatpush1.msra.mxu0 0.0
        %294 = vmatprep.subr.mxu0 0.0
        %295 = vmatpush1.msra.mxu0 0.0
        %296 = vmatprep.subr.mxu0 0.0
        %297 = vmatpush1.msra.mxu0 0.0
        %298 = vmatprep.subr.mxu0 0.0
        %299 = vmatpush1.msra.mxu0 0.0
        %300 = vmatprep.subr.mxu0 0.0
        %301 = vmatpush1.msra.mxu0 0.0
        %302 = vmatprep.subr.mxu0 0.0
        %303 = vmatpush1.msra.mxu0 0.0
        %304 = vmatprep.mubr.f32.mxu0 0.0
        %305 = vmatmul.mubr.f32.gmra.mrb[0].mxu0 %v231
        %v306 = vpop.f32.mrb[0].mxu0
        %v307 = vadd.f32 0.0, %v306
        %v308 = vpop.f32.mrb[0].mxu0
        %v309 = vadd.f32 0.0, %v308
        %310 = vdwg.mxu0
        %311 = vmatprep.subr.mxu0 0.0
        %312 = vmatpush1.msra.mxu0 %v238
        %313 = vmatprep.subr.mxu0 0.0
        %314 = vmatpush1.msra.mxu0 0.0
        %315 = vmatprep.subr.mxu0 0.0
        %316 = vmatpush1.msra.mxu0 0.0
        %317 = vmatprep.subr.mxu0 0.0
        %318 = vmatpush1.msra.mxu0 0.0
        %319 = vmatprep.subr.mxu0 0.0
        %320 = vmatpush1.msra.mxu0 0.0
        %321 = vmatprep.subr.mxu0 0.0
        %322 = vmatpush1.msra.mxu0 0.0
        %323 = vmatprep.subr.mxu0 0.0
        %324 = vmatpush1.msra.mxu0 0.0
        %325 = vmatprep.subr.mxu0 0.0
        %326 = vmatpush1.msra.mxu0 0.0
        %327 = vmatprep.subr.mxu0 0.0
        %328 = vmatpush1.msra.mxu0 0.0
        %329 = vmatprep.subr.mxu0 0.0
        %330 = vmatpush1.msra.mxu0 0.0
        %331 = vmatprep.subr.mxu0 0.0
        %332 = vmatpush1.msra.mxu0 0.0
        %333 = vmatprep.subr.mxu0 0.0
        %334 = vmatpush1.msra.mxu0 0.0
        %335 = vmatprep.subr.mxu0 0.0
        %336 = vmatpush1.msra.mxu0 0.0
        %337 = vmatprep.subr.mxu0 0.0
        %338 = vmatpush1.msra.mxu0 0.0
        %339 = vmatprep.subr.mxu0 0.0
        %340 = vmatpush1.msra.mxu0 0.0
        %341 = vmatprep.subr.mxu0 0.0
        %342 = vmatpush1.msra.mxu0 0.0
        %343 = vmatprep.subr.mxu0 0.0
        %344 = vmatpush1.msra.mxu0 0.0
        %345 = vmatprep.subr.mxu0 0.0
        %346 = vmatpush1.msra.mxu0 0.0
        %347 = vmatprep.subr.mxu0 0.0
        %348 = vmatpush1.msra.mxu0 0.0
        %349 = vmatprep.subr.mxu0 0.0
        %350 = vmatpush1.msra.mxu0 0.0
        %351 = vmatprep.subr.mxu0 0.0
        %352 = vmatpush1.msra.mxu0 0.0
        %353 = vmatprep.subr.mxu0 0.0
        %354 = vmatpush1.msra.mxu0 0.0
        %355 = vmatprep.subr.mxu0 0.0
        %356 = vmatpush1.msra.mxu0 0.0
        %357 = vmatprep.subr.mxu0 0.0
        %358 = vmatpush1.msra.mxu0 0.0
        %359 = vmatprep.subr.mxu0 0.0
        %360 = vmatpush1.msra.mxu0 0.0
        %361 = vmatprep.subr.mxu0 0.0
        %362 = vmatpush1.msra.mxu0 0.0
        %363 = vmatprep.subr.mxu0 0.0
        %364 = vmatpush1.msra.mxu0 0.0
        %365 = vmatprep.subr.mxu0 0.0
        %366 = vmatpush1.msra.mxu0 0.0
        %367 = vmatprep.subr.mxu0 0.0
        %368 = vmatpush1.msra.mxu0 0.0
        %369 = vmatprep.subr.mxu0 0.0
        %370 = vmatpush1.msra.mxu0 0.0
        %371 = vmatprep.subr.mxu0 0.0
        %372 = vmatpush1.msra.mxu0 0.0
        %373 = vmatprep.subr.mxu0 0.0
        %374 = vmatpush1.msra.mxu0 0.0
        %375 = vmatprep.mubr.f32.mxu0 0.0
        %376 = vmatmul.mubr.f32.gmra.mrb[0].mxu0 %v231
        %v377 = vpop.f32.mrb[0].mxu0
        %v378 = vadd.f32 0.0, %v377
        %v379 = vpop.f32.mrb[0].mxu0
        %380 = vdwg.mxu0
        %v382 = vsel %vm229, %v214, 0
        %v384 = vsel %vm233, %v212, 0
        %v386 = vsel %vm233, %v219, 0
        %v388 = vsel %vm233, %v213, 0
        %390 = vmatprep.subr.mxu0 %v386
        %391 = vmatpush1.msra.mxu0 %v384
        %392 = vmatprep.subr.mxu0 0.0
        %393 = vmatpush1.msra.mxu0 0.0
        %394 = vmatprep.subr.mxu0 0.0
        %395 = vmatpush1.msra.mxu0 0.0
        %396 = vmatprep.subr.mxu0 0.0
        %397 = vmatpush1.msra.mxu0 0.0
        %398 = vmatprep.subr.mxu0 0.0
        %399 = vmatpush1.msra.mxu0 0.0
        %400 = vmatprep.subr.mxu0 0.0
        %401 = vmatpush1.msra.mxu0 0.0
        %402 = vmatprep.subr.mxu0 0.0
        %403 = vmatpush1.msra.mxu0 0.0
        %404 = vmatprep.subr.mxu0 0.0
        %405 = vmatpush1.msra.mxu0 0.0
        %406 = vmatprep.subr.mxu0 0.0
        %407 = vmatpush1.msra.mxu0 0.0
        %408 = vmatprep.subr.mxu0 0.0
        %409 = vmatpush1.msra.mxu0 0.0
        %410 = vmatprep.subr.mxu0 0.0
        %411 = vmatpush1.msra.mxu0 0.0
        %412 = vmatprep.subr.mxu0 0.0
        %413 = vmatpush1.msra.mxu0 0.0
        %414 = vmatprep.subr.mxu0 0.0
        %415 = vmatpush1.msra.mxu0 0.0
        %416 = vmatprep.subr.mxu0 0.0
        %417 = vmatpush1.msra.mxu0 0.0
        %418 = vmatprep.subr.mxu0 0.0
        %419 = vmatpush1.msra.mxu0 0.0
        %420 = vmatprep.subr.mxu0 0.0
        %421 = vmatpush1.msra.mxu0 0.0
        %422 = vmatprep.subr.mxu0 0.0
        %423 = vmatpush1.msra.mxu0 0.0
        %424 = vmatprep.subr.mxu0 0.0
        %425 = vmatpush1.msra.mxu0 0.0
        %426 = vmatprep.subr.mxu0 0.0
        %427 = vmatpush1.msra.mxu0 0.0
        %428 = vmatprep.subr.mxu0 0.0
        %429 = vmatpush1.msra.mxu0 0.0
        %430 = vmatprep.subr.mxu0 0.0
        %431 = vmatpush1.msra.mxu0 0.0
        %432 = vmatprep.subr.mxu0 0.0
        %433 = vmatpush1.msra.mxu0 0.0
        %434 = vmatprep.subr.mxu0 0.0
        %435 = vmatpush1.msra.mxu0 0.0
        %436 = vmatprep.subr.mxu0 0.0
        %437 = vmatpush1.msra.mxu0 0.0
        %438 = vmatprep.subr.mxu0 0.0
        %439 = vmatpush1.msra.mxu0 0.0
        %440 = vmatprep.subr.mxu0 0.0
        %441 = vmatpush1.msra.mxu0 0.0
        %442 = vmatprep.subr.mxu0 0.0
        %443 = vmatpush1.msra.mxu0 0.0
        %444 = vmatprep.subr.mxu0 0.0
        %445 = vmatpush1.msra.mxu0 0.0
        %446 = vmatprep.subr.mxu0 0.0
        %447 = vmatpush1.msra.mxu0 0.0
        %448 = vmatprep.subr.mxu0 0.0
        %449 = vmatpush1.msra.mxu0 0.0
        %450 = vmatprep.subr.mxu0 0.0
        %451 = vmatpush1.msra.mxu0 0.0
        %452 = vmatprep.subr.mxu0 0.0
        %453 = vmatpush1.msra.mxu0 0.0
        %454 = vmatprep.mubr.f32.mxu0 0.0
        %455 = vmatmul.mubr.f32.gmra.mrb[0].mxu0 %v382
        %v456 = vpop.f32.mrb[0].mxu0
        %v457 = vadd.f32 %v307, %v456
        %v458 = vpop.f32.mrb[0].mxu0
        %v459 = vadd.f32 %v309, %v458
        %460 = vdwg.mxu0
        %461 = vmatprep.subr.mxu0 0.0
        %462 = vmatpush1.msra.mxu0 %v388
        %463 = vmatprep.subr.mxu0 0.0
        %464 = vmatpush1.msra.mxu0 0.0
        %465 = vmatprep.subr.mxu0 0.0
        %466 = vmatpush1.msra.mxu0 0.0
        %467 = vmatprep.subr.mxu0 0.0
        %468 = vmatpush1.msra.mxu0 0.0
        %469 = vmatprep.subr.mxu0 0.0
        %470 = vmatpush1.msra.mxu0 0.0
        %471 = vmatprep.subr.mxu0 0.0
        %472 = vmatpush1.msra.mxu0 0.0
        %473 = vmatprep.subr.mxu0 0.0
        %474 = vmatpush1.msra.mxu0 0.0
        %475 = vmatprep.subr.mxu0 0.0
        %476 = vmatpush1.msra.mxu0 0.0
        %477 = vmatprep.subr.mxu0 0.0
        %478 = vmatpush1.msra.mxu0 0.0
        %479 = vmatprep.subr.mxu0 0.0
        %480 = vmatpush1.msra.mxu0 0.0
        %481 = vmatprep.subr.mxu0 0.0
        %482 = vmatpush1.msra.mxu0 0.0
        %483 = vmatprep.subr.mxu0 0.0
        %484 = vmatpush1.msra.mxu0 0.0
        %485 = vmatprep.subr.mxu0 0.0
        %486 = vmatpush1.msra.mxu0 0.0
        %487 = vmatprep.subr.mxu0 0.0
        %488 = vmatpush1.msra.mxu0 0.0
        %489 = vmatprep.subr.mxu0 0.0
        %490 = vmatpush1.msra.mxu0 0.0
        %491 = vmatprep.subr.mxu0 0.0
        %492 = vmatpush1.msra.mxu0 0.0
        %493 = vmatprep.subr.mxu0 0.0
        %494 = vmatpush1.msra.mxu0 0.0
        %495 = vmatprep.subr.mxu0 0.0
        %496 = vmatpush1.msra.mxu0 0.0
        %497 = vmatprep.subr.mxu0 0.0
        %498 = vmatpush1.msra.mxu0 0.0
        %499 = vmatprep.subr.mxu0 0.0
        %500 = vmatpush1.msra.mxu0 0.0
        %501 = vmatprep.subr.mxu0 0.0
        %502 = vmatpush1.msra.mxu0 0.0
        %503 = vmatprep.subr.mxu0 0.0
        %504 = vmatpush1.msra.mxu0 0.0
        %505 = vmatprep.subr.mxu0 0.0
        %506 = vmatpush1.msra.mxu0 0.0
        %507 = vmatprep.subr.mxu0 0.0
        %508 = vmatpush1.msra.mxu0 0.0
        %509 = vmatprep.subr.mxu0 0.0
        %510 = vmatpush1.msra.mxu0 0.0
        %511 = vmatprep.subr.mxu0 0.0
        %512 = vmatpush1.msra.mxu0 0.0
        %513 = vmatprep.subr.mxu0 0.0
        %514 = vmatpush1.msra.mxu0 0.0
        %515 = vmatprep.subr.mxu0 0.0
        %516 = vmatpush1.msra.mxu0 0.0
        %517 = vmatprep.subr.mxu0 0.0
        %518 = vmatpush1.msra.mxu0 0.0
        %519 = vmatprep.subr.mxu0 0.0
        %520 = vmatpush1.msra.mxu0 0.0
        %521 = vmatprep.subr.mxu0 0.0
        %522 = vmatpush1.msra.mxu0 0.0
        %523 = vmatprep.subr.mxu0 0.0
        %524 = vmatpush1.msra.mxu0 0.0
        %525 = vmatprep.mubr.f32.mxu0 0.0
        %526 = vmatmul.mubr.f32.gmra.mrb[0].mxu0 %v382
        %v527 = vpop.f32.mrb[0].mxu0
        %v528 = vadd.f32 %v378, %v527
        %v529 = vpop.f32.mrb[0].mxu0
        %530 = vdwg.mxu0
        %v531 = vld [vmem:[%s207] sm:$0xff]
        %v532 = vld [vmem:[%s207 + $0x8] sm:$0xf]
        %s533 = scalar_lea.vmem %s211, 16
        %v534 = vld [vmem:[%s533] sm:$0xff]
        %v537 = vcombine.high %v531, %v531
        %538 = vrot.lane.b32.xlu0 %v531, 124
        %v539 = vpop.permute.xlu0 %538
        %540 = vrot.lane.b32.xlu0 %v537, 124
        %v541 = vpop.permute.xlu0 %540
        %542 = vrot.lane.b32.xlu0 %v532, 124
        %v543 = vpop.permute.xlu0 %542
        %vm544 = vcmask 1014784
        %v545 = vsel %vm544, %v539, %v541
        %v546 = vsel %vm544, %v541, %v543
        %v548 = vsel %vm229, %v534, 0
        %v550 = vsel %vm233, %v545, 0
        %v552 = vsel %vm233, %v546, 0
        %v554 = vsel %vm233, %v543, 0
        %556 = vmatprep.subr.mxu0 %v552
        %557 = vmatpush1.msra.mxu0 %v550
        %558 = vmatprep.subr.mxu0 0.0
        %559 = vmatpush1.msra.mxu0 0.0
        %560 = vmatprep.subr.mxu0 0.0
        %561 = vmatpush1.msra.mxu0 0.0
        %562 = vmatprep.subr.mxu0 0.0
        %563 = vmatpush1.msra.mxu0 0.0
        %564 = vmatprep.subr.mxu0 0.0
        %565 = vmatpush1.msra.mxu0 0.0
        %566 = vmatprep.subr.mxu0 0.0
        %567 = vmatpush1.msra.mxu0 0.0
        %568 = vmatprep.subr.mxu0 0.0
        %569 = vmatpush1.msra.mxu0 0.0
        %570 = vmatprep.subr.mxu0 0.0
        %571 = vmatpush1.msra.mxu0 0.0
        %572 = vmatprep.subr.mxu0 0.0
        %573 = vmatpush1.msra.mxu0 0.0
        %574 = vmatprep.subr.mxu0 0.0
        %575 = vmatpush1.msra.mxu0 0.0
        %576 = vmatprep.subr.mxu0 0.0
        %577 = vmatpush1.msra.mxu0 0.0
        %578 = vmatprep.subr.mxu0 0.0
        %579 = vmatpush1.msra.mxu0 0.0
        %580 = vmatprep.subr.mxu0 0.0
        %581 = vmatpush1.msra.mxu0 0.0
        %582 = vmatprep.subr.mxu0 0.0
        %583 = vmatpush1.msra.mxu0 0.0
        %584 = vmatprep.subr.mxu0 0.0
        %585 = vmatpush1.msra.mxu0 0.0
        %586 = vmatprep.subr.mxu0 0.0
        %587 = vmatpush1.msra.mxu0 0.0
        %588 = vmatprep.subr.mxu0 0.0
        %589 = vmatpush1.msra.mxu0 0.0
        %590 = vmatprep.subr.mxu0 0.0
        %591 = vmatpush1.msra.mxu0 0.0
        %592 = vmatprep.subr.mxu0 0.0
        %593 = vmatpush1.msra.mxu0 0.0
        %594 = vmatprep.subr.mxu0 0.0
        %595 = vmatpush1.msra.mxu0 0.0
        %596 = vmatprep.subr.mxu0 0.0
        %597 = vmatpush1.msra.mxu0 0.0
        %598 = vmatprep.subr.mxu0 0.0
        %599 = vmatpush1.msra.mxu0 0.0
        %600 = vmatprep.subr.mxu0 0.0
        %601 = vmatpush1.msra.mxu0 0.0
        %602 = vmatprep.subr.mxu0 0.0
        %603 = vmatpush1.msra.mxu0 0.0
        %604 = vmatprep.subr.mxu0 0.0
        %605 = vmatpush1.msra.mxu0 0.0
        %606 = vmatprep.subr.mxu0 0.0
        %607 = vmatpush1.msra.mxu0 0.0
        %608 = vmatprep.subr.mxu0 0.0
        %609 = vmatpush1.msra.mxu0 0.0
        %610 = vmatprep.subr.mxu0 0.0
        %611 = vmatpush1.msra.mxu0 0.0
        %612 = vmatprep.subr.mxu0 0.0
        %613 = vmatpush1.msra.mxu0 0.0
        %614 = vmatprep.subr.mxu0 0.0
        %615 = vmatpush1.msra.mxu0 0.0
        %616 = vmatprep.subr.mxu0 0.0
        %617 = vmatpush1.msra.mxu0 0.0
        %618 = vmatprep.subr.mxu0 0.0
        %619 = vmatpush1.msra.mxu0 0.0
        %620 = vmatprep.mubr.f32.mxu0 0.0
        %621 = vmatmul.mubr.f32.gmra.mrb[0].mxu0 %v548
        %v622 = vpop.f32.mrb[0].mxu0
        %v623 = vadd.f32 0.0, %v622
        %v624 = vpop.f32.mrb[0].mxu0
        %v625 = vadd.f32 0.0, %v624
        %626 = vdwg.mxu0
        %627 = vmatprep.subr.mxu0 0.0
        %628 = vmatpush1.msra.mxu0 %v554
        %629 = vmatprep.subr.mxu0 0.0
        %630 = vmatpush1.msra.mxu0 0.0
        %631 = vmatprep.subr.mxu0 0.0
        %632 = vmatpush1.msra.mxu0 0.0
        %633 = vmatprep.subr.mxu0 0.0
        %634 = vmatpush1.msra.mxu0 0.0
        %635 = vmatprep.subr.mxu0 0.0
        %636 = vmatpush1.msra.mxu0 0.0
        %637 = vmatprep.subr.mxu0 0.0
        %638 = vmatpush1.msra.mxu0 0.0
        %639 = vmatprep.subr.mxu0 0.0
        %640 = vmatpush1.msra.mxu0 0.0
        %641 = vmatprep.subr.mxu0 0.0
        %642 = vmatpush1.msra.mxu0 0.0
        %643 = vmatprep.subr.mxu0 0.0
        %644 = vmatpush1.msra.mxu0 0.0
        %645 = vmatprep.subr.mxu0 0.0
        %646 = vmatpush1.msra.mxu0 0.0
        %647 = vmatprep.subr.mxu0 0.0
        %648 = vmatpush1.msra.mxu0 0.0
        %649 = vmatprep.subr.mxu0 0.0
        %650 = vmatpush1.msra.mxu0 0.0
        %651 = vmatprep.subr.mxu0 0.0
        %652 = vmatpush1.msra.mxu0 0.0
        %653 = vmatprep.subr.mxu0 0.0
        %654 = vmatpush1.msra.mxu0 0.0
        %655 = vmatprep.subr.mxu0 0.0
        %656 = vmatpush1.msra.mxu0 0.0
        %657 = vmatprep.subr.mxu0 0.0
        %658 = vmatpush1.msra.mxu0 0.0
        %659 = vmatprep.subr.mxu0 0.0
        %660 = vmatpush1.msra.mxu0 0.0
        %661 = vmatprep.subr.mxu0 0.0
        %662 = vmatpush1.msra.mxu0 0.0
        %663 = vmatprep.subr.mxu0 0.0
        %664 = vmatpush1.msra.mxu0 0.0
        %665 = vmatprep.subr.mxu0 0.0
        %666 = vmatpush1.msra.mxu0 0.0
        %667 = vmatprep.subr.mxu0 0.0
        %668 = vmatpush1.msra.mxu0 0.0
        %669 = vmatprep.subr.mxu0 0.0
        %670 = vmatpush1.msra.mxu0 0.0
        %671 = vmatprep.subr.mxu0 0.0
        %672 = vmatpush1.msra.mxu0 0.0
        %673 = vmatprep.subr.mxu0 0.0
        %674 = vmatpush1.msra.mxu0 0.0
        %675 = vmatprep.subr.mxu0 0.0
        %676 = vmatpush1.msra.mxu0 0.0
        %677 = vmatprep.subr.mxu0 0.0
        %678 = vmatpush1.msra.mxu0 0.0
        %679 = vmatprep.subr.mxu0 0.0
        %680 = vmatpush1.msra.mxu0 0.0
        %681 = vmatprep.subr.mxu0 0.0
        %682 = vmatpush1.msra.mxu0 0.0
        %683 = vmatprep.subr.mxu0 0.0
        %684 = vmatpush1.msra.mxu0 0.0
        %685 = vmatprep.subr.mxu0 0.0
        %686 = vmatpush1.msra.mxu0 0.0
        %687 = vmatprep.subr.mxu0 0.0
        %688 = vmatpush1.msra.mxu0 0.0
        %689 = vmatprep.subr.mxu0 0.0
        %690 = vmatpush1.msra.mxu0 0.0
        %691 = vmatprep.mubr.f32.mxu0 0.0
        %692 = vmatmul.mubr.f32.gmra.mrb[0].mxu0 %v548
        %v693 = vpop.f32.mrb[0].mxu0
        %v694 = vadd.f32 0.0, %v693
        %v695 = vpop.f32.mrb[0].mxu0
        %696 = vdwg.mxu0
        %v697 = vadd.f32 %v457, %v623
        %v698 = vadd.f32 %v459, %v625
        %v699 = vadd.f32 %v528, %v694
        %v700 = vld [vmem:[%s207] sm:$0xff]
        %v701 = vld [vmem:[%s207 + $0x8] sm:$0xf]
        %s702 = scalar_lea.vmem %s211, 24
        %v703 = vld [vmem:[%s702] sm:$0xff]
        %v706 = vcombine.high %v700, %v700
        %707 = vrot.lane.b32.xlu0 %v700, 88
        %v708 = vpop.permute.xlu0 %707
        %709 = vrot.lane.b32.xlu0 %v706, 88
        %v710 = vpop.permute.xlu0 %709
        %711 = vrot.lane.b32.xlu0 %v701, 88
        %v712 = vpop.permute.xlu0 %711
        %vm713 = vcmask 719872
        %v714 = vsel %vm713, %v708, %v710
        %v715 = vsel %vm713, %v710, %v712
        %v717 = vsel %vm229, %v703, 0
        %v719 = vsel %vm233, %v714, 0
        %v721 = vsel %vm233, %v715, 0
        %v723 = vsel %vm233, %v712, 0
        %725 = vmatprep.subr.mxu0 %v721
        %726 = vmatpush1.msra.mxu0 %v719
        %727 = vmatprep.subr.mxu0 0.0
        %728 = vmatpush1.msra.mxu0 0.0
        %729 = vmatprep.subr.mxu0 0.0
        %730 = vmatpush1.msra.mxu0 0.0
        %731 = vmatprep.subr.mxu0 0.0
        %732 = vmatpush1.msra.mxu0 0.0
        %733 = vmatprep.subr.mxu0 0.0
        %734 = vmatpush1.msra.mxu0 0.0
        %735 = vmatprep.subr.mxu0 0.0
        %736 = vmatpush1.msra.mxu0 0.0
        %737 = vmatprep.subr.mxu0 0.0
        %738 = vmatpush1.msra.mxu0 0.0
        %739 = vmatprep.subr.mxu0 0.0
        %740 = vmatpush1.msra.mxu0 0.0
        %741 = vmatprep.subr.mxu0 0.0
        %742 = vmatpush1.msra.mxu0 0.0
        %743 = vmatprep.subr.mxu0 0.0
        %744 = vmatpush1.msra.mxu0 0.0
        %745 = vmatprep.subr.mxu0 0.0
        %746 = vmatpush1.msra.mxu0 0.0
        %747 = vmatprep.subr.mxu0 0.0
        %748 = vmatpush1.msra.mxu0 0.0
        %749 = vmatprep.subr.mxu0 0.0
        %750 = vmatpush1.msra.mxu0 0.0
        %751 = vmatprep.subr.mxu0 0.0
        %752 = vmatpush1.msra.mxu0 0.0
        %753 = vmatprep.subr.mxu0 0.0
        %754 = vmatpush1.msra.mxu0 0.0
        %755 = vmatprep.subr.mxu0 0.0
        %756 = vmatpush1.msra.mxu0 0.0
        %757 = vmatprep.subr.mxu0 0.0
        %758 = vmatpush1.msra.mxu0 0.0
        %759 = vmatprep.subr.mxu0 0.0
        %760 = vmatpush1.msra.mxu0 0.0
        %761 = vmatprep.subr.mxu0 0.0
        %762 = vmatpush1.msra.mxu0 0.0
        %763 = vmatprep.subr.mxu0 0.0
        %764 = vmatpush1.msra.mxu0 0.0
        %765 = vmatprep.subr.mxu0 0.0
        %766 = vmatpush1.msra.mxu0 0.0
        %767 = vmatprep.subr.mxu0 0.0
        %768 = vmatpush1.msra.mxu0 0.0
        %769 = vmatprep.subr.mxu0 0.0
        %770 = vmatpush1.msra.mxu0 0.0
        %771 = vmatprep.subr.mxu0 0.0
        %772 = vmatpush1.msra.mxu0 0.0
        %773 = vmatprep.subr.mxu0 0.0
        %774 = vmatpush1.msra.mxu0 0.0
        %775 = vmatprep.subr.mxu0 0.0
        %776 = vmatpush1.msra.mxu0 0.0
        %777 = vmatprep.subr.mxu0 0.0
        %778 = vmatpush1.msra.mxu0 0.0
        %779 = vmatprep.subr.mxu0 0.0
        %780 = vmatpush1.msra.mxu0 0.0
        %781 = vmatprep.subr.mxu0 0.0
        %782 = vmatpush1.msra.mxu0 0.0
        %783 = vmatprep.subr.mxu0 0.0
        %784 = vmatpush1.msra.mxu0 0.0
        %785 = vmatprep.subr.mxu0 0.0
        %786 = vmatpush1.msra.mxu0 0.0
        %787 = vmatprep.subr.mxu0 0.0
        %788 = vmatpush1.msra.mxu0 0.0
        %789 = vmatprep.mubr.f32.mxu0 0.0
        %790 = vmatmul.mubr.f32.gmra.mrb[0].mxu0 %v717
        %v791 = vpop.f32.mrb[0].mxu0
        %v792 = vadd.f32 0.0, %v791
        %v793 = vpop.f32.mrb[0].mxu0
        %v794 = vadd.f32 0.0, %v793
        %795 = vdwg.mxu0
        %796 = vmatprep.subr.mxu0 0.0
        %797 = vmatpush1.msra.mxu0 %v723
        %798 = vmatprep.subr.mxu0 0.0
        %799 = vmatpush1.msra.mxu0 0.0
        %800 = vmatprep.subr.mxu0 0.0
        %801 = vmatpush1.msra.mxu0 0.0
        %802 = vmatprep.subr.mxu0 0.0
        %803 = vmatpush1.msra.mxu0 0.0
        %804 = vmatprep.subr.mxu0 0.0
        %805 = vmatpush1.msra.mxu0 0.0
        %806 = vmatprep.subr.mxu0 0.0
        %807 = vmatpush1.msra.mxu0 0.0
        %808 = vmatprep.subr.mxu0 0.0
        %809 = vmatpush1.msra.mxu0 0.0
        %810 = vmatprep.subr.mxu0 0.0
        %811 = vmatpush1.msra.mxu0 0.0
        %812 = vmatprep.subr.mxu0 0.0
        %813 = vmatpush1.msra.mxu0 0.0
        %814 = vmatprep.subr.mxu0 0.0
        %815 = vmatpush1.msra.mxu0 0.0
        %816 = vmatprep.subr.mxu0 0.0
        %817 = vmatpush1.msra.mxu0 0.0
        %818 = vmatprep.subr.mxu0 0.0
        %819 = vmatpush1.msra.mxu0 0.0
        %820 = vmatprep.subr.mxu0 0.0
        %821 = vmatpush1.msra.mxu0 0.0
        %822 = vmatprep.subr.mxu0 0.0
        %823 = vmatpush1.msra.mxu0 0.0
        %824 = vmatprep.subr.mxu0 0.0
        %825 = vmatpush1.msra.mxu0 0.0
        %826 = vmatprep.subr.mxu0 0.0
        %827 = vmatpush1.msra.mxu0 0.0
        %828 = vmatprep.subr.mxu0 0.0
        %829 = vmatpush1.msra.mxu0 0.0
        %830 = vmatprep.subr.mxu0 0.0
        %831 = vmatpush1.msra.mxu0 0.0
        %832 = vmatprep.subr.mxu0 0.0
        %833 = vmatpush1.msra.mxu0 0.0
        %834 = vmatprep.subr.mxu0 0.0
        %835 = vmatpush1.msra.mxu0 0.0
        %836 = vmatprep.subr.mxu0 0.0
        %837 = vmatpush1.msra.mxu0 0.0
        %838 = vmatprep.subr.mxu0 0.0
        %839 = vmatpush1.msra.mxu0 0.0
        %840 = vmatprep.subr.mxu0 0.0
        %841 = vmatpush1.msra.mxu0 0.0
        %842 = vmatprep.subr.mxu0 0.0
        %843 = vmatpush1.msra.mxu0 0.0
        %844 = vmatprep.subr.mxu0 0.0
        %845 = vmatpush1.msra.mxu0 0.0
        %846 = vmatprep.subr.mxu0 0.0
        %847 = vmatpush1.msra.mxu0 0.0
        %848 = vmatprep.subr.mxu0 0.0
        %849 = vmatpush1.msra.mxu0 0.0
        %850 = vmatprep.subr.mxu0 0.0
        %851 = vmatpush1.msra.mxu0 0.0
        %852 = vmatprep.subr.mxu0 0.0
        %853 = vmatpush1.msra.mxu0 0.0
        %854 = vmatprep.subr.mxu0 0.0
        %855 = vmatpush1.msra.mxu0 0.0
        %856 = vmatprep.subr.mxu0 0.0
        %857 = vmatpush1.msra.mxu0 0.0
        %858 = vmatprep.subr.mxu0 0.0
        %859 = vmatpush1.msra.mxu0 0.0
        %860 = vmatprep.mubr.f32.mxu0 0.0
        %861 = vmatmul.mubr.f32.gmra.mrb[0].mxu0 %v717
        %v862 = vpop.f32.mrb[0].mxu0
        %v863 = vadd.f32 0.0, %v862
        %v864 = vpop.f32.mrb[0].mxu0
        %865 = vdwg.mxu0
        %v866 = vadd.f32 %v697, %v792
        %v867 = vadd.f32 %v698, %v794
        %v868 = vadd.f32 %v699, %v863
        %v869 = vld [vmem:[%s207] sm:$0xff]
        %v870 = vld [vmem:[%s207 + $0x8] sm:$0xf]
        %s871 = scalar_lea.vmem %s211, 32
        %v872 = vld [vmem:[%s871] sm:$0xff]
        %v875 = vcombine.high %v869, %v869
        %876 = vrot.lane.b32.xlu0 %v869, 86
        %v877 = vpop.permute.xlu0 %876
        %878 = vrot.lane.b32.xlu0 %v875, 86
        %v879 = vpop.permute.xlu0 %878
        %880 = vrot.lane.b32.xlu0 %v870, 86
        %v881 = vpop.permute.xlu0 %880
        %vm882 = vcmask 703488
        %v883 = vsel %vm882, %v877, %v879
        %v884 = vsel %vm882, %v879, %v881
        %v886 = vsel %vm229, %v872, 0
        %v888 = vsel %vm233, %v883, 0
        %v890 = vsel %vm233, %v884, 0
        %v892 = vsel %vm233, %v881, 0
        %894 = vmatprep.subr.mxu0 %v890
        %895 = vmatpush1.msra.mxu0 %v888
        %896 = vmatprep.subr.mxu0 0.0
        %897 = vmatpush1.msra.mxu0 0.0
        %898 = vmatprep.subr.mxu0 0.0
        %899 = vmatpush1.msra.mxu0 0.0
        %900 = vmatprep.subr.mxu0 0.0
        %901 = vmatpush1.msra.mxu0 0.0
        %902 = vmatprep.subr.mxu0 0.0
        %903 = vmatpush1.msra.mxu0 0.0
        %904 = vmatprep.subr.mxu0 0.0
        %905 = vmatpush1.msra.mxu0 0.0
        %906 = vmatprep.subr.mxu0 0.0
        %907 = vmatpush1.msra.mxu0 0.0
        %908 = vmatprep.subr.mxu0 0.0
        %909 = vmatpush1.msra.mxu0 0.0
        %910 = vmatprep.subr.mxu0 0.0
        %911 = vmatpush1.msra.mxu0 0.0
        %912 = vmatprep.subr.mxu0 0.0
        %913 = vmatpush1.msra.mxu0 0.0
        %914 = vmatprep.subr.mxu0 0.0
        %915 = vmatpush1.msra.mxu0 0.0
        %916 = vmatprep.subr.mxu0 0.0
        %917 = vmatpush1.msra.mxu0 0.0
        %918 = vmatprep.subr.mxu0 0.0
        %919 = vmatpush1.msra.mxu0 0.0
        %920 = vmatprep.subr.mxu0 0.0
        %921 = vmatpush1.msra.mxu0 0.0
        %922 = vmatprep.subr.mxu0 0.0
        %923 = vmatpush1.msra.mxu0 0.0
        %924 = vmatprep.subr.mxu0 0.0
        %925 = vmatpush1.msra.mxu0 0.0
        %926 = vmatprep.subr.mxu0 0.0
        %927 = vmatpush1.msra.mxu0 0.0
        %928 = vmatprep.subr.mxu0 0.0
        %929 = vmatpush1.msra.mxu0 0.0
        %930 = vmatprep.subr.mxu0 0.0
        %931 = vmatpush1.msra.mxu0 0.0
        %932 = vmatprep.subr.mxu0 0.0
        %933 = vmatpush1.msra.mxu0 0.0
        %934 = vmatprep.subr.mxu0 0.0
        %935 = vmatpush1.msra.mxu0 0.0
        %936 = vmatprep.subr.mxu0 0.0
        %937 = vmatpush1.msra.mxu0 0.0
        %938 = vmatprep.subr.mxu0 0.0
        %939 = vmatpush1.msra.mxu0 0.0
        %940 = vmatprep.subr.mxu0 0.0
        %941 = vmatpush1.msra.mxu0 0.0
        %942 = vmatprep.subr.mxu0 0.0
        %943 = vmatpush1.msra.mxu0 0.0
        %944 = vmatprep.subr.mxu0 0.0
        %945 = vmatpush1.msra.mxu0 0.0
        %946 = vmatprep.subr.mxu0 0.0
        %947 = vmatpush1.msra.mxu0 0.0
        %948 = vmatprep.subr.mxu0 0.0
        %949 = vmatpush1.msra.mxu0 0.0
        %950 = vmatprep.subr.mxu0 0.0
        %951 = vmatpush1.msra.mxu0 0.0
        %952 = vmatprep.subr.mxu0 0.0
        %953 = vmatpush1.msra.mxu0 0.0
        %954 = vmatprep.subr.mxu0 0.0
        %955 = vmatpush1.msra.mxu0 0.0
        %956 = vmatprep.subr.mxu0 0.0
        %957 = vmatpush1.msra.mxu0 0.0
        %958 = vmatprep.mubr.f32.mxu0 0.0
        %959 = vmatmul.mubr.f32.gmra.mrb[0].mxu0 %v886
        %v960 = vpop.f32.mrb[0].mxu0
        %v961 = vadd.f32 0.0, %v960
        %v962 = vpop.f32.mrb[0].mxu0
        %v963 = vadd.f32 0.0, %v962
        %964 = vdwg.mxu0
        %965 = vmatprep.subr.mxu0 0.0
        %966 = vmatpush1.msra.mxu0 %v892
        %967 = vmatprep.subr.mxu0 0.0
        %968 = vmatpush1.msra.mxu0 0.0
        %969 = vmatprep.subr.mxu0 0.0
        %970 = vmatpush1.msra.mxu0 0.0
        %971 = vmatprep.subr.mxu0 0.0
        %972 = vmatpush1.msra.mxu0 0.0
        %973 = vmatprep.subr.mxu0 0.0
        %974 = vmatpush1.msra.mxu0 0.0
        %975 = vmatprep.subr.mxu0 0.0
        %976 = vmatpush1.msra.mxu0 0.0
        %977 = vmatprep.subr.mxu0 0.0
        %978 = vmatpush1.msra.mxu0 0.0
        %979 = vmatprep.subr.mxu0 0.0
        %980 = vmatpush1.msra.mxu0 0.0
        %981 = vmatprep.subr.mxu0 0.0
        %982 = vmatpush1.msra.mxu0 0.0
        %983 = vmatprep.subr.mxu0 0.0
        %984 = vmatpush1.msra.mxu0 0.0
        %985 = vmatprep.subr.mxu0 0.0
        %986 = vmatpush1.msra.mxu0 0.0
        %987 = vmatprep.subr.mxu0 0.0
        %988 = vmatpush1.msra.mxu0 0.0
        %989 = vmatprep.subr.mxu0 0.0
        %990 = vmatpush1.msra.mxu0 0.0
        %991 = vmatprep.subr.mxu0 0.0
        %992 = vmatpush1.msra.mxu0 0.0
        %993 = vmatprep.subr.mxu0 0.0
        %994 = vmatpush1.msra.mxu0 0.0
        %995 = vmatprep.subr.mxu0 0.0
        %996 = vmatpush1.msra.mxu0 0.0
        %997 = vmatprep.subr.mxu0 0.0
        %998 = vmatpush1.msra.mxu0 0.0
        %999 = vmatprep.subr.mxu0 0.0
        %1000 = vmatpush1.msra.mxu0 0.0
        %1001 = vmatprep.subr.mxu0 0.0
        %1002 = vmatpush1.msra.mxu0 0.0
        %1003 = vmatprep.subr.mxu0 0.0
        %1004 = vmatpush1.msra.mxu0 0.0
        %1005 = vmatprep.subr.mxu0 0.0
        %1006 = vmatpush1.msra.mxu0 0.0
        %1007 = vmatprep.subr.mxu0 0.0
        %1008 = vmatpush1.msra.mxu0 0.0
        %1009 = vmatprep.subr.mxu0 0.0
        %1010 = vmatpush1.msra.mxu0 0.0
        %1011 = vmatprep.subr.mxu0 0.0
        %1012 = vmatpush1.msra.mxu0 0.0
        %1013 = vmatprep.subr.mxu0 0.0
        %1014 = vmatpush1.msra.mxu0 0.0
        %1015 = vmatprep.subr.mxu0 0.0
        %1016 = vmatpush1.msra.mxu0 0.0
        %1017 = vmatprep.subr.mxu0 0.0
        %1018 = vmatpush1.msra.mxu0 0.0
        %1019 = vmatprep.subr.mxu0 0.0
        %1020 = vmatpush1.msra.mxu0 0.0
        %1021 = vmatprep.subr.mxu0 0.0
        %1022 = vmatpush1.msra.mxu0 0.0
        %1023 = vmatprep.subr.mxu0 0.0
        %1024 = vmatpush1.msra.mxu0 0.0
        %1025 = vmatprep.subr.mxu0 0.0
        %1026 = vmatpush1.msra.mxu0 0.0
        %1027 = vmatprep.subr.mxu0 0.0
        %1028 = vmatpush1.msra.mxu0 0.0
        %1029 = vmatprep.mubr.f32.mxu0 0.0
        %1030 = vmatmul.mubr.f32.gmra.mrb[0].mxu0 %v886
        %v1031 = vpop.f32.mrb[0].mxu0
        %v1032 = vadd.f32 0.0, %v1031
        %v1033 = vpop.f32.mrb[0].mxu0
        %1034 = vdwg.mxu0
        %v1035 = vadd.f32 %v866, %v961
        %v1036 = vadd.f32 %v867, %v963
        %v1037 = vadd.f32 %v868, %v1032
        %v1038 = vld [vmem:[%s207] sm:$0xff]
        %v1039 = vld [vmem:[%s207 + $0x8] sm:$0xf]
        %s1040 = scalar_lea.vmem %s211, 40
        %v1041 = vld [vmem:[%s1040] sm:$0xff]
        %v1044 = vcombine.high %v1038, %v1038
        %1045 = vrot.lane.b32.xlu0 %v1038, 84
        %v1046 = vpop.permute.xlu0 %1045
        %1047 = vrot.lane.b32.xlu0 %v1044, 84
        %v1048 = vpop.permute.xlu0 %1047
        %1049 = vrot.lane.b32.xlu0 %v1039, 84
        %v1050 = vpop.permute.xlu0 %1049
        %vm1051 = vcmask 687104
        %v1052 = vsel %vm1051, %v1046, %v1048
        %v1053 = vsel %vm1051, %v1048, %v1050
        %v1055 = vsel %vm229, %v1041, 0
        %v1057 = vsel %vm233, %v1052, 0
        %v1059 = vsel %vm233, %v1053, 0
        %v1061 = vsel %vm233, %v1050, 0
        %1063 = vmatprep.subr.mxu0 %v1059
        %1064 = vmatpush1.msra.mxu0 %v1057
        %1065 = vmatprep.subr.mxu0 0.0
        %1066 = vmatpush1.msra.mxu0 0.0
        %1067 = vmatprep.subr.mxu0 0.0
        %1068 = vmatpush1.msra.mxu0 0.0
        %1069 = vmatprep.subr.mxu0 0.0
        %1070 = vmatpush1.msra.mxu0 0.0
        %1071 = vmatprep.subr.mxu0 0.0
        %1072 = vmatpush1.msra.mxu0 0.0
        %1073 = vmatprep.subr.mxu0 0.0
        %1074 = vmatpush1.msra.mxu0 0.0
        %1075 = vmatprep.subr.mxu0 0.0
        %1076 = vmatpush1.msra.mxu0 0.0
        %1077 = vmatprep.subr.mxu0 0.0
        %1078 = vmatpush1.msra.mxu0 0.0
        %1079 = vmatprep.subr.mxu0 0.0
        %1080 = vmatpush1.msra.mxu0 0.0
        %1081 = vmatprep.subr.mxu0 0.0
        %1082 = vmatpush1.msra.mxu0 0.0
        %1083 = vmatprep.subr.mxu0 0.0
        %1084 = vmatpush1.msra.mxu0 0.0
        %1085 = vmatprep.subr.mxu0 0.0
        %1086 = vmatpush1.msra.mxu0 0.0
        %1087 = vmatprep.subr.mxu0 0.0
        %1088 = vmatpush1.msra.mxu0 0.0
        %1089 = vmatprep.subr.mxu0 0.0
        %1090 = vmatpush1.msra.mxu0 0.0
        %1091 = vmatprep.subr.mxu0 0.0
        %1092 = vmatpush1.msra.mxu0 0.0
        %1093 = vmatprep.subr.mxu0 0.0
        %1094 = vmatpush1.msra.mxu0 0.0
        %1095 = vmatprep.subr.mxu0 0.0
        %1096 = vmatpush1.msra.mxu0 0.0
        %1097 = vmatprep.subr.mxu0 0.0
        %1098 = vmatpush1.msra.mxu0 0.0
        %1099 = vmatprep.subr.mxu0 0.0
        %1100 = vmatpush1.msra.mxu0 0.0
        %1101 = vmatprep.subr.mxu0 0.0
        %1102 = vmatpush1.msra.mxu0 0.0
        %1103 = vmatprep.subr.mxu0 0.0
        %1104 = vmatpush1.msra.mxu0 0.0
        %1105 = vmatprep.subr.mxu0 0.0
        %1106 = vmatpush1.msra.mxu0 0.0
        %1107 = vmatprep.subr.mxu0 0.0
        %1108 = vmatpush1.msra.mxu0 0.0
        %1109 = vmatprep.subr.mxu0 0.0
        %1110 = vmatpush1.msra.mxu0 0.0
        %1111 = vmatprep.subr.mxu0 0.0
        %1112 = vmatpush1.msra.mxu0 0.0
        %1113 = vmatprep.subr.mxu0 0.0
        %1114 = vmatpush1.msra.mxu0 0.0
        %1115 = vmatprep.subr.mxu0 0.0
        %1116 = vmatpush1.msra.mxu0 0.0
        %1117 = vmatprep.subr.mxu0 0.0
        %1118 = vmatpush1.msra.mxu0 0.0
        %1119 = vmatprep.subr.mxu0 0.0
        %1120 = vmatpush1.msra.mxu0 0.0
        %1121 = vmatprep.subr.mxu0 0.0
        %1122 = vmatpush1.msra.mxu0 0.0
        %1123 = vmatprep.subr.mxu0 0.0
        %1124 = vmatpush1.msra.mxu0 0.0
        %1125 = vmatprep.subr.mxu0 0.0
        %1126 = vmatpush1.msra.mxu0 0.0
        %1127 = vmatprep.mubr.f32.mxu0 0.0
        %1128 = vmatmul.mubr.f32.gmra.mrb[0].mxu0 %v1055
        %v1129 = vpop.f32.mrb[0].mxu0
        %v1130 = vadd.f32 0.0, %v1129
        %v1131 = vpop.f32.mrb[0].mxu0
        %v1132 = vadd.f32 0.0, %v1131
        %1133 = vdwg.mxu0
        %1134 = vmatprep.subr.mxu0 0.0
        %1135 = vmatpush1.msra.mxu0 %v1061
        %1136 = vmatprep.subr.mxu0 0.0
        %1137 = vmatpush1.msra.mxu0 0.0
        %1138 = vmatprep.subr.mxu0 0.0
        %1139 = vmatpush1.msra.mxu0 0.0
        %1140 = vmatprep.subr.mxu0 0.0
        %1141 = vmatpush1.msra.mxu0 0.0
        %1142 = vmatprep.subr.mxu0 0.0
        %1143 = vmatpush1.msra.mxu0 0.0
        %1144 = vmatprep.subr.mxu0 0.0
        %1145 = vmatpush1.msra.mxu0 0.0
        %1146 = vmatprep.subr.mxu0 0.0
        %1147 = vmatpush1.msra.mxu0 0.0
        %1148 = vmatprep.subr.mxu0 0.0
        %1149 = vmatpush1.msra.mxu0 0.0
        %1150 = vmatprep.subr.mxu0 0.0
        %1151 = vmatpush1.msra.mxu0 0.0
        %1152 = vmatprep.subr.mxu0 0.0
        %1153 = vmatpush1.msra.mxu0 0.0
        %1154 = vmatprep.subr.mxu0 0.0
        %1155 = vmatpush1.msra.mxu0 0.0
        %1156 = vmatprep.subr.mxu0 0.0
        %1157 = vmatpush1.msra.mxu0 0.0
        %1158 = vmatprep.subr.mxu0 0.0
        %1159 = vmatpush1.msra.mxu0 0.0
        %1160 = vmatprep.subr.mxu0 0.0
        %1161 = vmatpush1.msra.mxu0 0.0
        %1162 = vmatprep.subr.mxu0 0.0
        %1163 = vmatpush1.msra.mxu0 0.0
        %1164 = vmatprep.subr.mxu0 0.0
        %1165 = vmatpush1.msra.mxu0 0.0
        %1166 = vmatprep.subr.mxu0 0.0
        %1167 = vmatpush1.msra.mxu0 0.0
        %1168 = vmatprep.subr.mxu0 0.0
        %1169 = vmatpush1.msra.mxu0 0.0
        %1170 = vmatprep.subr.mxu0 0.0
        %1171 = vmatpush1.msra.mxu0 0.0
        %1172 = vmatprep.subr.mxu0 0.0
        %1173 = vmatpush1.msra.mxu0 0.0
        %1174 = vmatprep.subr.mxu0 0.0
        %1175 = vmatpush1.msra.mxu0 0.0
        %1176 = vmatprep.subr.mxu0 0.0
        %1177 = vmatpush1.msra.mxu0 0.0
        %1178 = vmatprep.subr.mxu0 0.0
        %1179 = vmatpush1.msra.mxu0 0.0
        %1180 = vmatprep.subr.mxu0 0.0
        %1181 = vmatpush1.msra.mxu0 0.0
        %1182 = vmatprep.subr.mxu0 0.0
        %1183 = vmatpush1.msra.mxu0 0.0
        %1184 = vmatprep.subr.mxu0 0.0
        %1185 = vmatpush1.msra.mxu0 0.0
        %1186 = vmatprep.subr.mxu0 0.0
        %1187 = vmatpush1.msra.mxu0 0.0
        %1188 = vmatprep.subr.mxu0 0.0
        %1189 = vmatpush1.msra.mxu0 0.0
        %1190 = vmatprep.subr.mxu0 0.0
        %1191 = vmatpush1.msra.mxu0 0.0
        %1192 = vmatprep.subr.mxu0 0.0
        %1193 = vmatpush1.msra.mxu0 0.0
        %1194 = vmatprep.subr.mxu0 0.0
        %1195 = vmatpush1.msra.mxu0 0.0
        %1196 = vmatprep.subr.mxu0 0.0
        %1197 = vmatpush1.msra.mxu0 0.0
        %1198 = vmatprep.mubr.f32.mxu0 0.0
        %1199 = vmatmul.mubr.f32.gmra.mrb[0].mxu0 %v1055
        %v1200 = vpop.f32.mrb[0].mxu0
        %v1201 = vadd.f32 0.0, %v1200
        %v1202 = vpop.f32.mrb[0].mxu0
        %1203 = vdwg.mxu0
        %v1204 = vadd.f32 %v1035, %v1130
        %v1205 = vadd.f32 %v1036, %v1132
        %v1206 = vadd.f32 %v1037, %v1201
        %v1207 = vld [vmem:[%s207] sm:$0xff]
        %v1208 = vld [vmem:[%s207 + $0x8] sm:$0xff]
        %s1209 = scalar_lea.vmem %s211, 48
        %v1210 = vld [vmem:[%s1209] sm:$0xff]
        %v1213 = vcombine.high %v1207, %v1207
        %v1214 = vcombine.high %v1208, %v1208
        %1215 = vrot.lane.b32.xlu0 %v1207, 48
        %v1216 = vpop.permute.xlu0 %1215
        %1217 = vrot.lane.b32.xlu0 %v1213, 48
        %v1218 = vpop.permute.xlu0 %1217
        %1219 = vrot.lane.b32.xlu0 %v1208, 48
        %v1220 = vpop.permute.xlu0 %1219
        %1221 = vrot.lane.b32.xlu0 %v1214, 48
        %v1222 = vpop.permute.xlu0 %1221
        %vm1223 = vcmask 392192
        %v1224 = vsel %vm1223, %v1216, %v1218
        %v1225 = vsel %vm1223, %v1218, %v1220
        %v1226 = vsel %vm1223, %v1220, %v1222
        %v1228 = vsel %vm229, %v1210, 0
        %v1230 = vsel %vm233, %v1224, 0
        %v1232 = vsel %vm233, %v1225, 0
        %v1234 = vsel %vm233, %v1226, 0
        %1236 = vmatprep.subr.mxu0 %v1232
        %1237 = vmatpush1.msra.mxu0 %v1230
        %1238 = vmatprep.subr.mxu0 0.0
        %1239 = vmatpush1.msra.mxu0 0.0
        %1240 = vmatprep.subr.mxu0 0.0
        %1241 = vmatpush1.msra.mxu0 0.0
        %1242 = vmatprep.subr.mxu0 0.0
        %1243 = vmatpush1.msra.mxu0 0.0
        %1244 = vmatprep.subr.mxu0 0.0
        %1245 = vmatpush1.msra.mxu0 0.0
        %1246 = vmatprep.subr.mxu0 0.0
        %1247 = vmatpush1.msra.mxu0 0.0
        %1248 = vmatprep.subr.mxu0 0.0
        %1249 = vmatpush1.msra.mxu0 0.0
        %1250 = vmatprep.subr.mxu0 0.0
        %1251 = vmatpush1.msra.mxu0 0.0
        %1252 = vmatprep.subr.mxu0 0.0
        %1253 = vmatpush1.msra.mxu0 0.0
        %1254 = vmatprep.subr.mxu0 0.0
        %1255 = vmatpush1.msra.mxu0 0.0
        %1256 = vmatprep.subr.mxu0 0.0
        %1257 = vmatpush1.msra.mxu0 0.0
        %1258 = vmatprep.subr.mxu0 0.0
        %1259 = vmatpush1.msra.mxu0 0.0
        %1260 = vmatprep.subr.mxu0 0.0
        %1261 = vmatpush1.msra.mxu0 0.0
        %1262 = vmatprep.subr.mxu0 0.0
        %1263 = vmatpush1.msra.mxu0 0.0
        %1264 = vmatprep.subr.mxu0 0.0
        %1265 = vmatpush1.msra.mxu0 0.0
        %1266 = vmatprep.subr.mxu0 0.0
        %1267 = vmatpush1.msra.mxu0 0.0
        %1268 = vmatprep.subr.mxu0 0.0
        %1269 = vmatpush1.msra.mxu0 0.0
        %1270 = vmatprep.subr.mxu0 0.0
        %1271 = vmatpush1.msra.mxu0 0.0
        %1272 = vmatprep.subr.mxu0 0.0
        %1273 = vmatpush1.msra.mxu0 0.0
        %1274 = vmatprep.subr.mxu0 0.0
        %1275 = vmatpush1.msra.mxu0 0.0
        %1276 = vmatprep.subr.mxu0 0.0
        %1277 = vmatpush1.msra.mxu0 0.0
        %1278 = vmatprep.subr.mxu0 0.0
        %1279 = vmatpush1.msra.mxu0 0.0
        %1280 = vmatprep.subr.mxu0 0.0
        %1281 = vmatpush1.msra.mxu0 0.0
        %1282 = vmatprep.subr.mxu0 0.0
        %1283 = vmatpush1.msra.mxu0 0.0
        %1284 = vmatprep.subr.mxu0 0.0
        %1285 = vmatpush1.msra.mxu0 0.0
        %1286 = vmatprep.subr.mxu0 0.0
        %1287 = vmatpush1.msra.mxu0 0.0
        %1288 = vmatprep.subr.mxu0 0.0
        %1289 = vmatpush1.msra.mxu0 0.0
        %1290 = vmatprep.subr.mxu0 0.0
        %1291 = vmatpush1.msra.mxu0 0.0
        %1292 = vmatprep.subr.mxu0 0.0
        %1293 = vmatpush1.msra.mxu0 0.0
        %1294 = vmatprep.subr.mxu0 0.0
        %1295 = vmatpush1.msra.mxu0 0.0
        %1296 = vmatprep.subr.mxu0 0.0
        %1297 = vmatpush1.msra.mxu0 0.0
        %1298 = vmatprep.subr.mxu0 0.0
        %1299 = vmatpush1.msra.mxu0 0.0
        %1300 = vmatprep.mubr.f32.mxu0 0.0
        %1301 = vmatmul.mubr.f32.gmra.mrb[0].mxu0 %v1228
        %v1302 = vpop.f32.mrb[0].mxu0
        %v1303 = vadd.f32 0.0, %v1302
        %v1304 = vpop.f32.mrb[0].mxu0
        %v1305 = vadd.f32 0.0, %v1304
        %1306 = vdwg.mxu0
        %1307 = vmatprep.subr.mxu0 0.0
        %1308 = vmatpush1.msra.mxu0 %v1234
        %1309 = vmatprep.subr.mxu0 0.0
        %1310 = vmatpush1.msra.mxu0 0.0
        %1311 = vmatprep.subr.mxu0 0.0
        %1312 = vmatpush1.msra.mxu0 0.0
        %1313 = vmatprep.subr.mxu0 0.0
        %1314 = vmatpush1.msra.mxu0 0.0
        %1315 = vmatprep.subr.mxu0 0.0
        %1316 = vmatpush1.msra.mxu0 0.0
        %1317 = vmatprep.subr.mxu0 0.0
        %1318 = vmatpush1.msra.mxu0 0.0
        %1319 = vmatprep.subr.mxu0 0.0
        %1320 = vmatpush1.msra.mxu0 0.0
        %1321 = vmatprep.subr.mxu0 0.0
        %1322 = vmatpush1.msra.mxu0 0.0
        %1323 = vmatprep.subr.mxu0 0.0
        %1324 = vmatpush1.msra.mxu0 0.0
        %1325 = vmatprep.subr.mxu0 0.0
        %1326 = vmatpush1.msra.mxu0 0.0
        %1327 = vmatprep.subr.mxu0 0.0
        %1328 = vmatpush1.msra.mxu0 0.0
        %1329 = vmatprep.subr.mxu0 0.0
        %1330 = vmatpush1.msra.mxu0 0.0
        %1331 = vmatprep.subr.mxu0 0.0
        %1332 = vmatpush1.msra.mxu0 0.0
        %1333 = vmatprep.subr.mxu0 0.0
        %1334 = vmatpush1.msra.mxu0 0.0
        %1335 = vmatprep.subr.mxu0 0.0
        %1336 = vmatpush1.msra.mxu0 0.0
        %1337 = vmatprep.subr.mxu0 0.0
        %1338 = vmatpush1.msra.mxu0 0.0
        %1339 = vmatprep.subr.mxu0 0.0
        %1340 = vmatpush1.msra.mxu0 0.0
        %1341 = vmatprep.subr.mxu0 0.0
        %1342 = vmatpush1.msra.mxu0 0.0
        %1343 = vmatprep.subr.mxu0 0.0
        %1344 = vmatpush1.msra.mxu0 0.0
        %1345 = vmatprep.subr.mxu0 0.0
        %1346 = vmatpush1.msra.mxu0 0.0
        %1347 = vmatprep.subr.mxu0 0.0
        %1348 = vmatpush1.msra.mxu0 0.0
        %1349 = vmatprep.subr.mxu0 0.0
        %1350 = vmatpush1.msra.mxu0 0.0
        %1351 = vmatprep.subr.mxu0 0.0
        %1352 = vmatpush1.msra.mxu0 0.0
        %1353 = vmatprep.subr.mxu0 0.0
        %1354 = vmatpush1.msra.mxu0 0.0
        %1355 = vmatprep.subr.mxu0 0.0
        %1356 = vmatpush1.msra.mxu0 0.0
        %1357 = vmatprep.subr.mxu0 0.0
        %1358 = vmatpush1.msra.mxu0 0.0
        %1359 = vmatprep.subr.mxu0 0.0
        %1360 = vmatpush1.msra.mxu0 0.0
        %1361 = vmatprep.subr.mxu0 0.0
        %1362 = vmatpush1.msra.mxu0 0.0
        %1363 = vmatprep.subr.mxu0 0.0
        %1364 = vmatpush1.msra.mxu0 0.0
        %1365 = vmatprep.subr.mxu0 0.0
        %1366 = vmatpush1.msra.mxu0 0.0
        %1367 = vmatprep.subr.mxu0 0.0
        %1368 = vmatpush1.msra.mxu0 0.0
        %1369 = vmatprep.subr.mxu0 0.0
        %1370 = vmatpush1.msra.mxu0 0.0
        %1371 = vmatprep.mubr.f32.mxu0 0.0
        %1372 = vmatmul.mubr.f32.gmra.mrb[0].mxu0 %v1228
        %v1373 = vpop.f32.mrb[0].mxu0
        %v1374 = vadd.f32 0.0, %v1373
        %v1375 = vpop.f32.mrb[0].mxu0
        %1376 = vdwg.mxu0
        %v1377 = vadd.f32 %v1204, %v1303
        %v1378 = vadd.f32 %v1205, %v1305
        %v1379 = vadd.f32 %v1206, %v1374
        %v1380 = vld [vmem:[%s207] sm:$0xff]
        %v1381 = vld [vmem:[%s207 + $0x8] sm:$0xff]
        %s1382 = scalar_lea.vmem %s211, 56
        %v1383 = vld [vmem:[%s1382] sm:$0xff]
        %v1386 = vcombine.high %v1380, %v1380
        %v1387 = vcombine.high %v1381, %v1381
        %1388 = vrot.lane.b32.xlu0 %v1380, 46
        %v1389 = vpop.permute.xlu0 %1388
        %1390 = vrot.lane.b32.xlu0 %v1386, 46
        %v1391 = vpop.permute.xlu0 %1390
        %1392 = vrot.lane.b32.xlu0 %v1381, 46
        %v1393 = vpop.permute.xlu0 %1392
        %1394 = vrot.lane.b32.xlu0 %v1387, 46
        %v1395 = vpop.permute.xlu0 %1394
        %vm1396 = vcmask 375808
        %v1397 = vsel %vm1396, %v1389, %v1391
        %v1398 = vsel %vm1396, %v1391, %v1393
        %v1399 = vsel %vm1396, %v1393, %v1395
        %v1401 = vsel %vm229, %v1383, 0
        %v1403 = vsel %vm233, %v1397, 0
        %v1405 = vsel %vm233, %v1398, 0
        %v1407 = vsel %vm233, %v1399, 0
        %1409 = vmatprep.subr.mxu0 %v1405
        %1410 = vmatpush1.msra.mxu0 %v1403
        %1411 = vmatprep.subr.mxu0 0.0
        %1412 = vmatpush1.msra.mxu0 0.0
        %1413 = vmatprep.subr.mxu0 0.0
        %1414 = vmatpush1.msra.mxu0 0.0
        %1415 = vmatprep.subr.mxu0 0.0
        %1416 = vmatpush1.msra.mxu0 0.0
        %1417 = vmatprep.subr.mxu0 0.0
        %1418 = vmatpush1.msra.mxu0 0.0
        %1419 = vmatprep.subr.mxu0 0.0
        %1420 = vmatpush1.msra.mxu0 0.0
        %1421 = vmatprep.subr.mxu0 0.0
        %1422 = vmatpush1.msra.mxu0 0.0
        %1423 = vmatprep.subr.mxu0 0.0
        %1424 = vmatpush1.msra.mxu0 0.0
        %1425 = vmatprep.subr.mxu0 0.0
        %1426 = vmatpush1.msra.mxu0 0.0
        %1427 = vmatprep.subr.mxu0 0.0
        %1428 = vmatpush1.msra.mxu0 0.0
        %1429 = vmatprep.subr.mxu0 0.0
        %1430 = vmatpush1.msra.mxu0 0.0
        %1431 = vmatprep.subr.mxu0 0.0
        %1432 = vmatpush1.msra.mxu0 0.0
        %1433 = vmatprep.subr.mxu0 0.0
        %1434 = vmatpush1.msra.mxu0 0.0
        %1435 = vmatprep.subr.mxu0 0.0
        %1436 = vmatpush1.msra.mxu0 0.0
        %1437 = vmatprep.subr.mxu0 0.0
        %1438 = vmatpush1.msra.mxu0 0.0
        %1439 = vmatprep.subr.mxu0 0.0
        %1440 = vmatpush1.msra.mxu0 0.0
        %1441 = vmatprep.subr.mxu0 0.0
        %1442 = vmatpush1.msra.mxu0 0.0
        %1443 = vmatprep.subr.mxu0 0.0
        %1444 = vmatpush1.msra.mxu0 0.0
        %1445 = vmatprep.subr.mxu0 0.0
        %1446 = vmatpush1.msra.mxu0 0.0
        %1447 = vmatprep.subr.mxu0 0.0
        %1448 = vmatpush1.msra.mxu0 0.0
        %1449 = vmatprep.subr.mxu0 0.0
        %1450 = vmatpush1.msra.mxu0 0.0
        %1451 = vmatprep.subr.mxu0 0.0
        %1452 = vmatpush1.msra.mxu0 0.0
        %1453 = vmatprep.subr.mxu0 0.0
        %1454 = vmatpush1.msra.mxu0 0.0
        %1455 = vmatprep.subr.mxu0 0.0
        %1456 = vmatpush1.msra.mxu0 0.0
        %1457 = vmatprep.subr.mxu0 0.0
        %1458 = vmatpush1.msra.mxu0 0.0
        %1459 = vmatprep.subr.mxu0 0.0
        %1460 = vmatpush1.msra.mxu0 0.0
        %1461 = vmatprep.subr.mxu0 0.0
        %1462 = vmatpush1.msra.mxu0 0.0
        %1463 = vmatprep.subr.mxu0 0.0
        %1464 = vmatpush1.msra.mxu0 0.0
        %1465 = vmatprep.subr.mxu0 0.0
        %1466 = vmatpush1.msra.mxu0 0.0
        %1467 = vmatprep.subr.mxu0 0.0
        %1468 = vmatpush1.msra.mxu0 0.0
        %1469 = vmatprep.subr.mxu0 0.0
        %1470 = vmatpush1.msra.mxu0 0.0
        %1471 = vmatprep.subr.mxu0 0.0
        %1472 = vmatpush1.msra.mxu0 0.0
        %1473 = vmatprep.mubr.f32.mxu0 0.0
        %1474 = vmatmul.mubr.f32.gmra.mrb[0].mxu0 %v1401
        %v1475 = vpop.f32.mrb[0].mxu0
        %v1476 = vadd.f32 0.0, %v1475
        %v1477 = vpop.f32.mrb[0].mxu0
        %v1478 = vadd.f32 0.0, %v1477
        %1479 = vdwg.mxu0
        %1480 = vmatprep.subr.mxu0 0.0
        %1481 = vmatpush1.msra.mxu0 %v1407
        %1482 = vmatprep.subr.mxu0 0.0
        %1483 = vmatpush1.msra.mxu0 0.0
        %1484 = vmatprep.subr.mxu0 0.0
        %1485 = vmatpush1.msra.mxu0 0.0
        %1486 = vmatprep.subr.mxu0 0.0
        %1487 = vmatpush1.msra.mxu0 0.0
        %1488 = vmatprep.subr.mxu0 0.0
        %1489 = vmatpush1.msra.mxu0 0.0
        %1490 = vmatprep.subr.mxu0 0.0
        %1491 = vmatpush1.msra.mxu0 0.0
        %1492 = vmatprep.subr.mxu0 0.0
        %1493 = vmatpush1.msra.mxu0 0.0
        %1494 = vmatprep.subr.mxu0 0.0
        %1495 = vmatpush1.msra.mxu0 0.0
        %1496 = vmatprep.subr.mxu0 0.0
        %1497 = vmatpush1.msra.mxu0 0.0
        %1498 = vmatprep.subr.mxu0 0.0
        %1499 = vmatpush1.msra.mxu0 0.0
        %1500 = vmatprep.subr.mxu0 0.0
        %1501 = vmatpush1.msra.mxu0 0.0
        %1502 = vmatprep.subr.mxu0 0.0
        %1503 = vmatpush1.msra.mxu0 0.0
        %1504 = vmatprep.subr.mxu0 0.0
        %1505 = vmatpush1.msra.mxu0 0.0
        %1506 = vmatprep.subr.mxu0 0.0
        %1507 = vmatpush1.msra.mxu0 0.0
        %1508 = vmatprep.subr.mxu0 0.0
        %1509 = vmatpush1.msra.mxu0 0.0
        %1510 = vmatprep.subr.mxu0 0.0
        %1511 = vmatpush1.msra.mxu0 0.0
        %1512 = vmatprep.subr.mxu0 0.0
        %1513 = vmatpush1.msra.mxu0 0.0
        %1514 = vmatprep.subr.mxu0 0.0
        %1515 = vmatpush1.msra.mxu0 0.0
        %1516 = vmatprep.subr.mxu0 0.0
        %1517 = vmatpush1.msra.mxu0 0.0
        %1518 = vmatprep.subr.mxu0 0.0
        %1519 = vmatpush1.msra.mxu0 0.0
        %1520 = vmatprep.subr.mxu0 0.0
        %1521 = vmatpush1.msra.mxu0 0.0
        %1522 = vmatprep.subr.mxu0 0.0
        %1523 = vmatpush1.msra.mxu0 0.0
        %1524 = vmatprep.subr.mxu0 0.0
        %1525 = vmatpush1.msra.mxu0 0.0
        %1526 = vmatprep.subr.mxu0 0.0
        %1527 = vmatpush1.msra.mxu0 0.0
        %1528 = vmatprep.subr.mxu0 0.0
        %1529 = vmatpush1.msra.mxu0 0.0
        %1530 = vmatprep.subr.mxu0 0.0
        %1531 = vmatpush1.msra.mxu0 0.0
        %1532 = vmatprep.subr.mxu0 0.0
        %1533 = vmatpush1.msra.mxu0 0.0
        %1534 = vmatprep.subr.mxu0 0.0
        %1535 = vmatpush1.msra.mxu0 0.0
        %1536 = vmatprep.subr.mxu0 0.0
        %1537 = vmatpush1.msra.mxu0 0.0
        %1538 = vmatprep.subr.mxu0 0.0
        %1539 = vmatpush1.msra.mxu0 0.0
        %1540 = vmatprep.subr.mxu0 0.0
        %1541 = vmatpush1.msra.mxu0 0.0
        %1542 = vmatprep.subr.mxu0 0.0
        %1543 = vmatpush1.msra.mxu0 0.0
        %1544 = vmatprep.mubr.f32.mxu0 0.0
        %1545 = vmatmul.mubr.f32.gmra.mrb[0].mxu0 %v1401
        %v1546 = vpop.f32.mrb[0].mxu0
        %v1547 = vadd.f32 0.0, %v1546
        %v1548 = vpop.f32.mrb[0].mxu0
        %1549 = vdwg.mxu0
        %v1550 = vadd.f32 %v1377, %v1476
        %v1551 = vadd.f32 %v1378, %v1478
        %v1552 = vadd.f32 %v1379, %v1547
        %v1553 = vld [vmem:[%s207] sm:$0xff]
        %v1554 = vld [vmem:[%s207 + $0x8] sm:$0xff]
        %s1555 = scalar_lea.vmem %s211, 64
        %v1556 = vld [vmem:[%s1555] sm:$0xff]
        %v1559 = vcombine.high %v1553, %v1553
        %v1560 = vcombine.high %v1554, %v1554
        %1561 = vrot.lane.b32.xlu0 %v1553, 44
        %v1562 = vpop.permute.xlu0 %1561
        %1563 = vrot.lane.b32.xlu0 %v1559, 44
        %v1564 = vpop.permute.xlu0 %1563
        %1565 = vrot.lane.b32.xlu0 %v1554, 44
        %v1566 = vpop.permute.xlu0 %1565
        %1567 = vrot.lane.b32.xlu0 %v1560, 44
        %v1568 = vpop.permute.xlu0 %1567
        %vm1569 = vcmask 359424
        %v1570 = vsel %vm1569, %v1562, %v1564
        %v1571 = vsel %vm1569, %v1564, %v1566
        %v1572 = vsel %vm1569, %v1566, %v1568
        %v1574 = vsel %vm229, %v1556, 0
        %v1576 = vsel %vm233, %v1570, 0
        %v1578 = vsel %vm233, %v1571, 0
        %v1580 = vsel %vm233, %v1572, 0
        %1582 = vmatprep.subr.mxu0 %v1578
        %1583 = vmatpush1.msra.mxu0 %v1576
        %1584 = vmatprep.subr.mxu0 0.0
        %1585 = vmatpush1.msra.mxu0 0.0
        %1586 = vmatprep.subr.mxu0 0.0
        %1587 = vmatpush1.msra.mxu0 0.0
        %1588 = vmatprep.subr.mxu0 0.0
        %1589 = vmatpush1.msra.mxu0 0.0
        %1590 = vmatprep.subr.mxu0 0.0
        %1591 = vmatpush1.msra.mxu0 0.0
        %1592 = vmatprep.subr.mxu0 0.0
        %1593 = vmatpush1.msra.mxu0 0.0
        %1594 = vmatprep.subr.mxu0 0.0
        %1595 = vmatpush1.msra.mxu0 0.0
        %1596 = vmatprep.subr.mxu0 0.0
        %1597 = vmatpush1.msra.mxu0 0.0
        %1598 = vmatprep.subr.mxu0 0.0
        %1599 = vmatpush1.msra.mxu0 0.0
        %1600 = vmatprep.subr.mxu0 0.0
        %1601 = vmatpush1.msra.mxu0 0.0
        %1602 = vmatprep.subr.mxu0 0.0
        %1603 = vmatpush1.msra.mxu0 0.0
        %1604 = vmatprep.subr.mxu0 0.0
        %1605 = vmatpush1.msra.mxu0 0.0
        %1606 = vmatprep.subr.mxu0 0.0
        %1607 = vmatpush1.msra.mxu0 0.0
        %1608 = vmatprep.subr.mxu0 0.0
        %1609 = vmatpush1.msra.mxu0 0.0
        %1610 = vmatprep.subr.mxu0 0.0
        %1611 = vmatpush1.msra.mxu0 0.0
        %1612 = vmatprep.subr.mxu0 0.0
        %1613 = vmatpush1.msra.mxu0 0.0
        %1614 = vmatprep.subr.mxu0 0.0
        %1615 = vmatpush1.msra.mxu0 0.0
        %1616 = vmatprep.subr.mxu0 0.0
        %1617 = vmatpush1.msra.mxu0 0.0
        %1618 = vmatprep.subr.mxu0 0.0
        %1619 = vmatpush1.msra.mxu0 0.0
        %1620 = vmatprep.subr.mxu0 0.0
        %1621 = vmatpush1.msra.mxu0 0.0
        %1622 = vmatprep.subr.mxu0 0.0
        %1623 = vmatpush1.msra.mxu0 0.0
        %1624 = vmatprep.subr.mxu0 0.0
        %1625 = vmatpush1.msra.mxu0 0.0
        %1626 = vmatprep.subr.mxu0 0.0
        %1627 = vmatpush1.msra.mxu0 0.0
        %1628 = vmatprep.subr.mxu0 0.0
        %1629 = vmatpush1.msra.mxu0 0.0
        %1630 = vmatprep.subr.mxu0 0.0
        %1631 = vmatpush1.msra.mxu0 0.0
        %1632 = vmatprep.subr.mxu0 0.0
        %1633 = vmatpush1.msra.mxu0 0.0
        %1634 = vmatprep.subr.mxu0 0.0
        %1635 = vmatpush1.msra.mxu0 0.0
        %1636 = vmatprep.subr.mxu0 0.0
        %1637 = vmatpush1.msra.mxu0 0.0
        %1638 = vmatprep.subr.mxu0 0.0
        %1639 = vmatpush1.msra.mxu0 0.0
        %1640 = vmatprep.subr.mxu0 0.0
        %1641 = vmatpush1.msra.mxu0 0.0
        %1642 = vmatprep.subr.mxu0 0.0
        %1643 = vmatpush1.msra.mxu0 0.0
        %1644 = vmatprep.subr.mxu0 0.0
        %1645 = vmatpush1.msra.mxu0 0.0
        %1646 = vmatprep.mubr.f32.mxu0 0.0
        %1647 = vmatmul.mubr.f32.gmra.mrb[0].mxu0 %v1574
        %v1648 = vpop.f32.mrb[0].mxu0
        %v1649 = vadd.f32 0.0, %v1648
        %v1650 = vpop.f32.mrb[0].mxu0
        %v1651 = vadd.f32 0.0, %v1650
        %1652 = vdwg.mxu0
        %1653 = vmatprep.subr.mxu0 0.0
        %1654 = vmatpush1.msra.mxu0 %v1580
        %1655 = vmatprep.subr.mxu0 0.0
        %1656 = vmatpush1.msra.mxu0 0.0
        %1657 = vmatprep.subr.mxu0 0.0
        %1658 = vmatpush1.msra.mxu0 0.0
        %1659 = vmatprep.subr.mxu0 0.0
        %1660 = vmatpush1.msra.mxu0 0.0
        %1661 = vmatprep.subr.mxu0 0.0
        %1662 = vmatpush1.msra.mxu0 0.0
        %1663 = vmatprep.subr.mxu0 0.0
        %1664 = vmatpush1.msra.mxu0 0.0
        %1665 = vmatprep.subr.mxu0 0.0
        %1666 = vmatpush1.msra.mxu0 0.0
        %1667 = vmatprep.subr.mxu0 0.0
        %1668 = vmatpush1.msra.mxu0 0.0
        %1669 = vmatprep.subr.mxu0 0.0
        %1670 = vmatpush1.msra.mxu0 0.0
        %1671 = vmatprep.subr.mxu0 0.0
        %1672 = vmatpush1.msra.mxu0 0.0
        %1673 = vmatprep.subr.mxu0 0.0
        %1674 = vmatpush1.msra.mxu0 0.0
        %1675 = vmatprep.subr.mxu0 0.0
        %1676 = vmatpush1.msra.mxu0 0.0
        %1677 = vmatprep.subr.mxu0 0.0
        %1678 = vmatpush1.msra.mxu0 0.0
        %1679 = vmatprep.subr.mxu0 0.0
        %1680 = vmatpush1.msra.mxu0 0.0
        %1681 = vmatprep.subr.mxu0 0.0
        %1682 = vmatpush1.msra.mxu0 0.0
        %1683 = vmatprep.subr.mxu0 0.0
        %1684 = vmatpush1.msra.mxu0 0.0
        %1685 = vmatprep.subr.mxu0 0.0
        %1686 = vmatpush1.msra.mxu0 0.0
        %1687 = vmatprep.subr.mxu0 0.0
        %1688 = vmatpush1.msra.mxu0 0.0
        %1689 = vmatprep.subr.mxu0 0.0
        %1690 = vmatpush1.msra.mxu0 0.0
        %1691 = vmatprep.subr.mxu0 0.0
        %1692 = vmatpush1.msra.mxu0 0.0
        %1693 = vmatprep.subr.mxu0 0.0
        %1694 = vmatpush1.msra.mxu0 0.0
        %1695 = vmatprep.subr.mxu0 0.0
        %1696 = vmatpush1.msra.mxu0 0.0
        %1697 = vmatprep.subr.mxu0 0.0
        %1698 = vmatpush1.msra.mxu0 0.0
        %1699 = vmatprep.subr.mxu0 0.0
        %1700 = vmatpush1.msra.mxu0 0.0
        %1701 = vmatprep.subr.mxu0 0.0
        %1702 = vmatpush1.msra.mxu0 0.0
        %1703 = vmatprep.subr.mxu0 0.0
        %1704 = vmatpush1.msra.mxu0 0.0
        %1705 = vmatprep.subr.mxu0 0.0
        %1706 = vmatpush1.msra.mxu0 0.0
        %1707 = vmatprep.subr.mxu0 0.0
        %1708 = vmatpush1.msra.mxu0 0.0
        %1709 = vmatprep.subr.mxu0 0.0
        %1710 = vmatpush1.msra.mxu0 0.0
        %1711 = vmatprep.subr.mxu0 0.0
        %1712 = vmatpush1.msra.mxu0 0.0
        %1713 = vmatprep.subr.mxu0 0.0
        %1714 = vmatpush1.msra.mxu0 0.0
        %1715 = vmatprep.subr.mxu0 0.0
        %1716 = vmatpush1.msra.mxu0 0.0
        %1717 = vmatprep.mubr.f32.mxu0 0.0
        %1718 = vmatmul.mubr.f32.gmra.mrb[0].mxu0 %v1574
        %v1719 = vpop.f32.mrb[0].mxu0
        %v1720 = vadd.f32 0.0, %v1719
        %v1721 = vpop.f32.mrb[0].mxu0
        %1722 = vdwg.mxu0
        %v1723 = vadd.f32 %v1550, %v1649
        %v1724 = vadd.f32 %v1551, %v1651
        %v1725 = vadd.f32 %v1552, %v1720
        %p1726 = scmp.eq.s32.totalorder %s22, 0
        // Predicated region
        $region33: #{tpu_custom_call.1} parent=31 // pred_check
          %p1727 = pneg %p1726
        $region34: #{tpu_custom_call.1} parent=31 // pred_check_branch
          %1729 = sbr.rel (%p1727) target = $region36
        $region35: #{tpu_custom_call.1} parent=31 // pred_region
          %1730 = vst [vmem:[#allocation2] sm:$0xff] %v1723
          %1731 = vst [vmem:[#allocation2 + $0x8] sm:$0xff] %v1724
          %vm1732 = vcmask 523264
          %1733 = vst.msk [vmem:[#allocation2 + $0x10] sm:$0xff] %vm1732, %v1725
        $region36: #{tpu_custom_call.1} parent=31 // pred_fallthru
          _
        %p1734 = scmp.ne.s32.totalorder %s22, 0
        // Predicated region
        $region37: #{tpu_custom_call.1} parent=31 // pred_check
          %p1735 = pneg %p1734
        $region38: #{tpu_custom_call.1} parent=31 // pred_check_branch
          %1737 = sbr.rel (%p1735) target = $region40
        $region39: #{tpu_custom_call.1} parent=31 // pred_region
          %v1738 = vld [vmem:[#allocation2] sm:$0xff]
          %v1739 = vld [vmem:[#allocation2 + $0x8] sm:$0xff]
          %v1740 = vld [vmem:[#allocation2 + $0x10] sm:$0xff]
          %v1741 = vadd.f32 %v1738, %v1723
          %v1742 = vadd.f32 %v1739, %v1724
          %v1743 = vadd.f32 %v1740, %v1725
          %1744 = vst [vmem:[#allocation2] sm:$0xff] %v1741
          %1745 = vst [vmem:[#allocation2 + $0x8] sm:$0xff] %v1742
          %vm1746 = vcmask 523264
          %1747 = vst.msk [vmem:[#allocation2 + $0x10] sm:$0xff] %vm1746, %v1743
        $region40: #{tpu_custom_call.1} parent=31 // pred_fallthru
          _
        // Predicated region
        $region41: #{tpu_custom_call.1} parent=31 // pred_check
          %p1748 = pneg %p1726
        $region42: #{tpu_custom_call.1} parent=31 // pred_check_branch
          %1750 = sbr.rel (%p1748) target = $region44
        $region43: #{tpu_custom_call.1} parent=31 // pred_region
          %v1751 = vld [vmem:[#allocation2] sm:$0xff]
          %v1752 = vld [vmem:[#allocation2 + $0x8] sm:$0xff]
          %v1753 = vld [vmem:[#allocation2 + $0x10] sm:$0xff]
          %v1754 = vld [vmem:[%s2] sm:$0xff]
          %1756 = vset.pattern.permute.xlu0 0
          %1757 = vperm.xlu0 %1756, %v1754
          %v1758 = vpop.permute.xlu0 %1757
          %v1760 = vadd.f32 %v1751, %v1758
          %v1761 = vadd.f32 %v1752, %v1758
          %v1762 = vadd.f32 %v1753, %v1758
          %v1763 = vmax.f32 %v1760, 0.0
          %v1764 = vmax.f32 %v1761, 0.0
          %v1765 = vmax.f32 %v1762, 0.0
          %1766 = vst [vmem:[%s198] sm:$0xff] %v1763
          %1767 = vst [vmem:[%s198 + $0x8] sm:$0xff] %v1764
          %vm1768 = vcmask 523264
          %1769 = vst.msk [vmem:[%s198 + $0x10] sm:$0xff] %vm1768, %v1765
        $region44: #{tpu_custom_call.1} parent=31 // pred_fallthru
          _
        %s1770 = sand.u32 %s112, 1
        %s1771 = scalar_lea.sflag [#allocation4], %s1770
        %s1772 = sand.u32 %s112, 1
        %s1773 = smul.addr %s1772, 24
        %s1774 = scalar_lea.vmem [#allocation3], %s1773
        // Predicated region
        $region45: #{tpu_custom_call.1} parent=31 // pred_check
          %p1775 = pneg %p122
        $region46: #{tpu_custom_call.1} parent=31 // pred_check_branch
          %1777 = sbr.rel (%p1775) target = $region48
        $region47: #{tpu_custom_call.1} parent=31 // pred_region
          %s1779 = ssub.s32 384, 384
          %1780 = vsyncadd %s1771, %s1779
          %s1781 = smul.addr %s21, 3
          %s1782 = smul.addr %s1781, 128
          %s1783 = scalar_lea.hbm %s3, %s1782
          %s1785 = sshll.u32 %s1774, 4
          %s1786 = int_to_ptr.vmem [resolvable:$true] %s1785
          %1788 = dma.vmem_to_hbm [thread:$0]  %s1786, 384, %s1783, %s1771
        $region48: #{tpu_custom_call.1} parent=31 // pred_fallthru
          _
      $region32: #{tpu_custom_call.1} parent=5 // pred_fallthru
        _
      %p1789 = scmp.le.s32.totalorder 2, %s12
      // Predicated region
      $region49: #{tpu_custom_call.1} parent=5 // pred_check
        %p1790 = pneg %p1789
      $region50: #{tpu_custom_call.1} parent=5 // pred_check_branch
        %1792 = sbr.rel (%p1790) target = $region52
      $region51: #{tpu_custom_call.1} parent=5 // pred_region
        %s1793 = ssub.s32 %s12, 2
        // Predicated region
        $region53: #{tpu_custom_call.1} parent=51 // pred_check
          %p1794 = pneg %p128
        $region54: #{tpu_custom_call.1} parent=51 // pred_check_branch
          %1796 = sbr.rel (%p1794) target = $region56
        $region55: #{tpu_custom_call.1} parent=51 // pred_region
          %s1797 = sand.u32 %s113, 1
          %s1798 = scalar_lea.sflag [#allocation4], %s1797
          %s1799 = sand.u32 %s113, 1
          %s1800 = smul.addr %s1799, 24
          %s1801 = scalar_lea.vmem [#allocation3], %s1800
          %1802 = dma.done %s1798, 384
        $region56: #{tpu_custom_call.1} parent=51 // pred_fallthru
          _
      $region52: #{tpu_custom_call.1} parent=5 // pred_fallthru
        _
    $region6: #{tpu_custom_call.1} parent=1 // loop_footer
      %s16 = sadd.s32 1, %s12
    $region7: #{tpu_custom_call.1} parent=1 // loop_footer_branch
      %11 = sbr.rel target = $region3
    $region8: #{tpu_custom_call.1} parent=1 // loop_exit
      _
    %1803 = vsyncpa [#allocation4], 1
    %s1804 = scalar_lea.sflag [#allocation4], 1
    %1805 = vsyncpa %s1804, 1

</llo_original>
